<compile_context>
chip_gen: v7x
topology: tpu7x:2x2x1
jax: 0.10.0
libtpu: 0.0.40
codegen_flags: <defaults>
</compile_context>

<pallas_src>
import functools

import jax
import jax.numpy as jnp
from jax.experimental import pallas as pl
from jax.experimental.pallas import tpu as pltpu


def _round_up(x: int, m: int) -> int:
    return (x + m - 1) // m * m


def _vmem_capacity_bytes() -> int:
    try:
        info = pltpu.get_tpu_info()
        cap = getattr(info, "vmem_capacity_bytes", None)
        if cap:
            return int(cap)
    except Exception:
        pass
    return 64 << 20  # conservative default: v7x per-TensorCore VMEM


# ----------------------------------------------------------------------------
# Path A: one-hot MXU gather with the table VMEM-resident (small/medium vocab).
# ----------------------------------------------------------------------------
def _onehot_gather_kernel(ids_ref, iota_ref, emb_ref, out_ref, *, l2_norm: bool,
                          eps: float):
    """Per-tile embedding gather + optional L2 normalization.

    ids_ref  : (TM, 1)            int32   sampled ids for this tile
    iota_ref : (1, VOCAB_pad)     int32   hoisted column iota (constant)
    emb_ref  : (VOCAB_pad, D)     table   full table, native dtype, Buffered(1)
    out_ref  : (TM, D)            table-dtype output tile
    """
    ids = ids_ref[...]                                    # (TM, 1)
    col = iota_ref[...]                                   # (1, Vp)
    # One-hot gather on the MXU: 0/1 are exact in bf16, so the gathered values
    # equal the table rows exactly (f32 accumulation).
    onehot = (col == ids).astype(emb_ref.dtype)           # (TM, Vp)
    emb = jnp.dot(onehot, emb_ref[...], preferred_element_type=jnp.float32)

    if l2_norm:
        # x / clamp(||x||, eps)  ==  x * rsqrt(clamp(sum(x^2), eps^2))
        sumsq = jnp.sum(emb * emb, axis=-1, keepdims=True)
        emb = emb * jax.lax.rsqrt(jnp.maximum(sumsq, eps * eps))

    out_ref[...] = emb.astype(out_ref.dtype)


# ----------------------------------------------------------------------------
# Path B: DMA row gather (scalar-prefetch ids drive the table index_map).
# Scales in VOCAB (O(M*D) bytes), used when the table does not fit VMEM.
# ----------------------------------------------------------------------------
def _row_gather_kernel(ids_sref, row_ref, out_ref, *, l2_norm: bool, eps: float):
    del ids_sref  # only used inside the BlockSpec index_maps
    row = row_ref[...].astype(jnp.float32)                # (1, 1, D)
    if l2_norm:
        sumsq = jnp.sum(row * row, axis=-1, keepdims=True)
        row = row * jax.lax.rsqrt(jnp.maximum(sumsq, eps * eps))
    out_ref[...] = row.astype(out_ref.dtype)


def _row_gather(sampled_ids_flat: jax.Array, emb_table: jax.Array,
                l2_norm: bool, eps: float) -> jax.Array:
    m = int(sampled_ids_flat.shape[0])
    vocab, d = emb_table.shape
    table3 = emb_table.reshape(vocab, 1, d)
    ids = sampled_ids_flat.astype(jnp.int32)

    out = pl.pallas_call(
        functools.partial(_row_gather_kernel, l2_norm=l2_norm, eps=eps),
        out_shape=jax.ShapeDtypeStruct((m, 1, d), emb_table.dtype),
        grid_spec=pltpu.PrefetchScalarGridSpec(
            num_scalar_prefetch=1,
            grid=(m,),
            in_specs=[
                # Data-dependent row fetch: block index along vocab = ids[i].
                pl.BlockSpec((1, 1, d), lambda i, sid: (sid[i], 0, 0)),
            ],
            out_specs=pl.BlockSpec((1, 1, d), lambda i, sid: (i, 0, 0)),
        ),
        compiler_params=pltpu.CompilerParams(
            dimension_semantics=("arbitrary",)),
    )(ids, table3)
    return out.reshape(m, d)


# ----------------------------------------------------------------------------
# Dispatcher
# ----------------------------------------------------------------------------
def _pallas_gather_l2norm(sampled_ids_flat: jax.Array,
                          emb_table: jax.Array,
                          l2_norm: bool,
                          eps: float,
                          *,
                          gather_impl: str = "auto",
                          tile_m: int = 512) -> jax.Array:
    """sampled_ids_flat: (M,) int32 ; emb_table: (VOCAB, D) -> (M, D) table-dtype."""
    m = int(sampled_ids_flat.shape[0])
    vocab, d = emb_table.shape
    itemsize = jnp.dtype(emb_table.dtype).itemsize

    # Lane/sublane-clean contraction axis (also a multiple of 16 for bf16).
    vocab_pad = max(128, _round_up(vocab, 128))
    # M tile: big enough to amortize per-step overhead; single step for M<=512.
    m8 = _round_up(max(m, 8), 8)
    tm = min(_round_up(tile_m, 8), m8)
    m_pad = _round_up(m, tm)
    d_lane = _round_up(d, 128)  # VMEM lane footprint of one row

    # VMEM footprint estimate of the one-hot (table-resident) path.
    needed = (vocab_pad * d_lane * itemsize        # table, Buffered(1)
              + 8 * vocab_pad * 4                  # iota row (sublane padded)
              + 2 * tm * 128 * 4                   # (TM,1) i32 ids, lane padded, x2
              + 2 * tm * d_lane * itemsize         # output tile, x2
              + tm * vocab_pad * itemsize          # one-hot intermediate
              + tm * d_lane * 4                    # f32 matmul accumulator
              + (4 << 20))                         # headroom for internal scratch

    if gather_impl == "auto":
        use_onehot = (needed <= _vmem_capacity_bytes() // 2) and (vocab_pad <= 4096)
    else:
        use_onehot = gather_impl == "onehot"

    if not use_onehot:
        return _row_gather(sampled_ids_flat, emb_table, l2_norm, eps)

    table = emb_table
    if vocab_pad != vocab:
        table = jnp.pad(table, ((0, vocab_pad - vocab), (0, 0)))
    ids = jnp.zeros((m_pad, 1), jnp.int32).at[:m, 0].set(
        sampled_ids_flat.astype(jnp.int32))
    iota_row = jax.lax.broadcasted_iota(jnp.int32, (1, vocab_pad), 1)

    kernel = functools.partial(_onehot_gather_kernel, l2_norm=l2_norm, eps=eps)
    # v5e's default scoped VMEM limit is 16 MiB (v6e/v7x: 32 MiB).
    vmem_limit = int(needed) if needed > (16 << 20) else None
    n_steps = m_pad // tm

    out = pl.pallas_call(
        kernel,
        out_shape=jax.ShapeDtypeStruct((m_pad, d), emb_table.dtype),
        grid_spec=pltpu.PrefetchScalarGridSpec(
            num_scalar_prefetch=0,
            grid=(n_steps,),
            in_specs=[
                # Per-tile ids block (double-buffered, tiny hidden DMA).
                pl.BlockSpec((tm, 1), lambda i: (i, 0)),
                # Hoisted column iota: constant, single-buffered.
                pl.BlockSpec((1, vocab_pad), lambda i: (0, 0),
                             pipeline_mode=pl.Buffered(1)),
                # Whole table resident in native dtype, single-buffered
                # (constant index_map -> never re-fetched).
                pl.BlockSpec((vocab_pad, d), lambda i: (0, 0),
                             pipeline_mode=pl.Buffered(1)),
            ],
            out_specs=pl.BlockSpec((tm, d), lambda i: (i, 0)),
        ),
        compiler_params=pltpu.CompilerParams(
            dimension_semantics=(("parallel",) if n_steps >= 4 else ("arbitrary",)),
            vmem_limit_bytes=vmem_limit,
        ),
    )(ids, iota_row, table)

    return out if m_pad == m else out[:m]


# ----------------------------------------------------------------------------
# Module forward
# ----------------------------------------------------------------------------
def local_negatives_sampler_forward(positive_ids: jax.Array,
                                    num_to_sample: int,
                                    all_item_ids: jax.Array,
                                    emb_table: jax.Array,
                                    l2_norm: bool,
                                    l2_norm_eps: float,
                                    rng_key: jax.Array,
                                    *,
                                    gather_impl: str = "auto"):
    """Forward of LocalNegativesSampler.

    Returns (sampled_ids, sampled_negative_embeddings) with shapes
    positive_ids.shape + (num_to_sample,) and positive_ids.shape + (num_to_sample, D).
    """
    num_items = all_item_ids.shape[0]
    output_shape = tuple(positive_ids.shape) + (num_to_sample,)

    # torch.randint(low=0, high=num_items, size=output_shape)
    # TODO(synk): torch RNG stream cannot be bit-reproduced; jax.random used instead.
    sampled_offsets = jax.random.randint(
        rng_key, shape=output_shape, minval=0, maxval=num_items, dtype=jnp.int32)

    # sampled_ids = self._all_item_ids[sampled_offsets.view(-1)].reshape(output_shape)
    sampled_ids = jnp.take(all_item_ids, sampled_offsets.reshape(-1)).reshape(output_shape)
    sampled_ids = sampled_ids.astype(positive_ids.dtype)

    d = emb_table.shape[1]
    emb_flat = _pallas_gather_l2norm(
        sampled_ids.reshape(-1).astype(jnp.int32), emb_table, l2_norm, l2_norm_eps,
        gather_impl=gather_impl)
    sampled_emb = emb_flat.reshape(output_shape + (d,))
    return sampled_ids, sampled_emb


# ----------------------------------------------------------------------------
# Pure-JAX reference + self-test
# ----------------------------------------------------------------------------
def _reference(sampled_ids, emb_table, l2_norm, eps):
    flat = sampled_ids.reshape(-1).astype(jnp.int32)
    emb = jnp.take(emb_table, flat, axis=0).astype(jnp.float32)
    if l2_norm:
        norm = jnp.linalg.norm(emb, ord=2, axis=-1, keepdims=True)
        emb = emb / jnp.maximum(norm, eps)
    emb = emb.reshape(sampled_ids.shape + (emb_table.shape[1],))
    return emb.astype(emb_table.dtype)


if __name__ == "__main__":
    key = jax.random.PRNGKey(0)
    k_emb, k_pos, k_s1, k_s2, k_s3 = jax.random.split(key, 5)

    # Deterministic synthetic "module parameters".
    NUM_ITEMS = 64          # len(all_item_ids)
    VOCAB = 100             # embedding table rows (ids live in [1, NUM_ITEMS])
    D = 32                  # embedding dim
    L2_NORM = True
    L2_NORM_EPS = 1e-6

    all_item_ids = jnp.arange(1, NUM_ITEMS + 1, dtype=jnp.int32)
    emb_table_f32 = jax.random.normal(k_emb, (VOCAB, D), dtype=jnp.float32)
    emb_table_bf16 = emb_table_f32.astype(jnp.bfloat16)

    # Inputs: positive_ids (B, N), num_to_sample. M = B*N*num_to_sample = 512.
    B, N, NUM_TO_SAMPLE = 2, 64, 4
    positive_ids = jax.random.randint(k_pos, (B, N), 1, NUM_ITEMS + 1, dtype=jnp.int32)

    # --- 1) bf16 table + L2 norm, auto (one-hot MXU gather, table resident) ---
    ids1, emb1 = local_negatives_sampler_forward(
        positive_ids, NUM_TO_SAMPLE, all_item_ids, emb_table_bf16,
        L2_NORM, L2_NORM_EPS, k_s1)
    jax.block_until_ready(emb1)
    assert ids1.shape == (B, N, NUM_TO_SAMPLE)
    assert emb1.shape == (B, N, NUM_TO_SAMPLE, D)
    assert emb1.dtype == emb_table_bf16.dtype
    ref1 = _reference(ids1, emb_table_bf16, L2_NORM, L2_NORM_EPS)
    assert jnp.allclose(emb1.astype(jnp.float32), ref1.astype(jnp.float32),
                        atol=1e-2, rtol=1e-2), "bf16/l2 one-hot path mismatch"

    # --- 2) f32 table, no normalization (exact gather path) ---
    ids2, emb2 = local_negatives_sampler_forward(
        positive_ids, NUM_TO_SAMPLE, all_item_ids, emb_table_f32,
        False, L2_NORM_EPS, k_s2)
    jax.block_until_ready(emb2)
    ref2 = _reference(ids2, emb_table_f32, False, L2_NORM_EPS)
    assert jnp.allclose(emb2, ref2, atol=1e-6, rtol=1e-6), "f32 gather mismatch"

    # --- 3) forced DMA row-gather fallback (large-vocab / v7x path) ---
    ids3, emb3 = local_negatives_sampler_forward(
        positive_ids, NUM_TO_SAMPLE, all_item_ids, emb_table_bf16,
        L2_NORM, L2_NORM_EPS, k_s3, gather_impl="row")
    jax.block_until_ready(emb3)
    ref3 = _reference(ids3, emb_table_bf16, L2_NORM, L2_NORM_EPS)
    assert emb3.dtype == emb_table_bf16.dtype
    assert jnp.allclose(emb3.astype(jnp.float32), ref3.astype(jnp.float32),
                        atol=1e-2, rtol=1e-2), "row-gather fallback mismatch"

    print("KERNEL_OK")
</pallas_src>

<mosaic_0001>
module attributes {stable_mosaic.version = 11 : i64} {
  func.func @_onehot_gather_kernel(%arg0: i32, %arg1: memref<512x1xi32, #tpu.memory_space<vmem>>, %arg2: memref<1x128xi32, #tpu.memory_space<vmem>>, %arg3: memref<128x32xbf16, #tpu.memory_space<vmem>>, %arg4: memref<512x32xbf16, #tpu.memory_space<vmem>>) attributes {dimension_semantics = [#tpu.dimension_semantics<arbitrary>], iteration_bounds = array<i64: 1>, scalar_prefetch = 0 : i64, scratch_operands = 0 : i64, tpu.core_type = #tpu.core_type<tc>, window_params = [{transform_indices = @transform_0, window_bounds = array<i64: 512, 1>}, {pipeline_mode = #tpu.pipeline_mode<synchronous>, transform_indices = @transform_1, window_bounds = array<i64: 1, 128>}, {pipeline_mode = #tpu.pipeline_mode<synchronous>, transform_indices = @transform_2, window_bounds = array<i64: 128, 32>}, {transform_indices = @transform_3, window_bounds = array<i64: 512, 32>}]} {
    %c0 = arith.constant 0 : index
    %c0_0 = arith.constant 0 : index
    %0 = vector.load %arg1[%c0, %c0_0] : memref<512x1xi32, #tpu.memory_space<vmem>>, vector<512x1xi32>
    %c0_1 = arith.constant 0 : index
    %c0_2 = arith.constant 0 : index
    %1 = vector.load %arg2[%c0_1, %c0_2] : memref<1x128xi32, #tpu.memory_space<vmem>>, vector<1x128xi32>
    %2 = vector.broadcast %1 : vector<1x128xi32> to vector<512x128xi32>
    %3 = vector.broadcast %0 : vector<512x1xi32> to vector<512x128xi32>
    %4 = arith.cmpi eq, %2, %3 : vector<512x128xi32>
    %5 = arith.extui %4 : vector<512x128xi1> to vector<512x128xi32>
    %6 = arith.sitofp %5 : vector<512x128xi32> to vector<512x128xf32>
    %7 = arith.truncf %6 : vector<512x128xf32> to vector<512x128xbf16>
    %c0_3 = arith.constant 0 : index
    %c0_4 = arith.constant 0 : index
    %8 = vector.load %arg3[%c0_3, %c0_4] : memref<128x32xbf16, #tpu.memory_space<vmem>>, vector<128x32xbf16>
    %cst = arith.constant dense<0.000000e+00> : vector<512x32xf32>
    %9 = tpu.matmul %7, %8, %cst {dimension_numbers = #tpu.dot_dimension_numbers<[1], [0], [0], [1], [0, 0, 1, 1], [], []>} : vector<512x128xbf16>, vector<128x32xbf16>, vector<512x32xf32> -> vector<512x32xf32>
    %10 = arith.mulf %9, %9 : vector<512x32xf32>
    %cst_5 = arith.constant dense<0.000000e+00> : vector<512xf32>
    %11 = vector.multi_reduction <add>, %10, %cst_5 [1] : vector<512x32xf32> to vector<512xf32>
    %12 = vector.shape_cast %11 : vector<512xf32> to vector<512x1xf32>
    %cst_6 = arith.constant 9.99999996E-13 : f32
    %13 = vector.broadcast %cst_6 : f32 to vector<512x1xf32>
    %14 = arith.maximumf %12, %13 : vector<512x1xf32>
    %15 = math.rsqrt %14 : vector<512x1xf32>
    %16 = vector.broadcast %15 : vector<512x1xf32> to vector<512x32xf32>
    %17 = arith.mulf %9, %16 : vector<512x32xf32>
    %18 = arith.truncf %17 : vector<512x32xf32> to vector<512x32xbf16>
    %c0_7 = arith.constant 0 : index
    %c0_8 = arith.constant 0 : index
    %19 = vector.load %arg4[%c0_7, %c0_8] : memref<512x32xbf16, #tpu.memory_space<vmem>>, vector<512x32xbf16>
    tpu.vector_store %arg4[%c0_7, %c0_8], %18 {strides = array<i32>} : memref<512x32xbf16, #tpu.memory_space<vmem>>, vector<512x32xbf16>,
    return
  }
  func.func @transform_0(%arg0: i32) -> (i32, i32) {
    %c0_i32 = arith.constant 0 : i32
    %c0_i32_0 = arith.constant 0 : i32
    return %arg0, %c0_i32 : i32, i32
  }
  func.func @transform_1(%arg0: i32) -> (i32, i32) {
    %c0_i32 = arith.constant 0 : i32
    %c0_i32_0 = arith.constant 0 : i32
    %c0_i32_1 = arith.constant 0 : i32
    return %c0_i32, %c0_i32_0 : i32, i32
  }
  func.func @transform_2(%arg0: i32) -> (i32, i32) {
    %c0_i32 = arith.constant 0 : i32
    %c0_i32_0 = arith.constant 0 : i32
    %c0_i32_1 = arith.constant 0 : i32
    return %c0_i32, %c0_i32_0 : i32, i32
  }
  func.func @transform_3(%arg0: i32) -> (i32, i32) {
    %c0_i32 = arith.constant 0 : i32
    %c0_i32_0 = arith.constant 0 : i32
    return %arg0, %c0_i32 : i32, i32
  }
}

</mosaic_0001>

<llo_original>
// kernel: tpu_custom_call.1
$region0: #{tpu_custom_call.1}
  #allocation0 [shape = 'u32[]', space=smem, size = 0x4, offset = 0x4, fixed_abs, tag = 'smem constant byte address 0x4 - core index']
  #allocation1 [shape = 'u32[144,128]{1,0:T(1,128)}', space=vmem, size = 0x12000, scoped, tag = 'internal scratch']
  %s0 = inlined_call_operand.vmem [shape: s32[512,1], index: 0, kind: input, shape index: {}]
  %s1 = inlined_call_operand.vmem [shape: s32[1,128], index: 1, kind: input, shape index: {}]
  %s2 = inlined_call_operand.vmem [shape: bf16[128,32], index: 2, kind: input, shape index: {}]
  %s3 = inlined_call_operand.vmem [shape: bf16[512,32], index: 3, kind: output, shape index: {}]
  %s4 = sld [smem:[#allocation0]]
  $region22: #{tpu_custom_call.1} parent=0
    _
  %s6 = ssub.s32 1, %s4
  %s7 = scalar_select 0, %s6, %s4
  // Predicated region
  $region2: #{tpu_custom_call.1} parent=0 // pred_check
    _
  $region3: #{tpu_custom_call.1} parent=0 // pred_check_branch
    %9 = sbr.rel (0) target = $region5
  $region4: #{tpu_custom_call.1} parent=0 // pred_region
    _
  $region5: #{tpu_custom_call.1} parent=0 // pred_fallthru
    _
  // Predicated region
  $region6: #{tpu_custom_call.1} parent=0 // pred_check
    _
  $region7: #{tpu_custom_call.1} parent=0 // pred_check_branch
    %11 = sbr.rel (0) target = $region9
  $region8: #{tpu_custom_call.1} parent=0 // pred_region
    _
  $region9: #{tpu_custom_call.1} parent=0 // pred_fallthru
    _
  // Predicated region
  $region10: #{tpu_custom_call.1} parent=0 // pred_check
    _
  $region11: #{tpu_custom_call.1} parent=0 // pred_check_branch
    %13 = sbr.rel (0) target = $region13
  $region12: #{tpu_custom_call.1} parent=0 // pred_region
    _
  $region13: #{tpu_custom_call.1} parent=0 // pred_fallthru
    _
  %v15 = vld [vmem:[%s0] sm:$0xff]
  %v16 = vld [vmem:[%s0 + $0x8] sm:$0xff]
  %v17 = vld [vmem:[%s0 + $0x10] sm:$0xff]
  %v18 = vld [vmem:[%s0 + $0x18] sm:$0xff]
  %v19 = vld [vmem:[%s0 + $0x20] sm:$0xff]
  %v20 = vld [vmem:[%s0 + $0x28] sm:$0xff]
  %v21 = vld [vmem:[%s0 + $0x30] sm:$0xff]
  %v22 = vld [vmem:[%s0 + $0x38] sm:$0xff]
  %v23 = vld [vmem:[%s0 + $0x40] sm:$0xff]
  %v24 = vld [vmem:[%s0 + $0x48] sm:$0xff]
  %v25 = vld [vmem:[%s0 + $0x50] sm:$0xff]
  %v26 = vld [vmem:[%s0 + $0x58] sm:$0xff]
  %v27 = vld [vmem:[%s0 + $0x60] sm:$0xff]
  %v28 = vld [vmem:[%s0 + $0x68] sm:$0xff]
  %v29 = vld [vmem:[%s0 + $0x70] sm:$0xff]
  %v30 = vld [vmem:[%s0 + $0x78] sm:$0xff]
  %v31 = vld [vmem:[%s0 + $0x80] sm:$0xff]
  %v32 = vld [vmem:[%s0 + $0x88] sm:$0xff]
  %v33 = vld [vmem:[%s0 + $0x90] sm:$0xff]
  %v34 = vld [vmem:[%s0 + $0x98] sm:$0xff]
  %v35 = vld [vmem:[%s0 + $0xa0] sm:$0xff]
  %v36 = vld [vmem:[%s0 + $0xa8] sm:$0xff]
  %v37 = vld [vmem:[%s0 + $0xb0] sm:$0xff]
  %v38 = vld [vmem:[%s0 + $0xb8] sm:$0xff]
  %v39 = vld [vmem:[%s0 + $0xc0] sm:$0xff]
  %v40 = vld [vmem:[%s0 + $0xc8] sm:$0xff]
  %v41 = vld [vmem:[%s0 + $0xd0] sm:$0xff]
  %v42 = vld [vmem:[%s0 + $0xd8] sm:$0xff]
  %v43 = vld [vmem:[%s0 + $0xe0] sm:$0xff]
  %v44 = vld [vmem:[%s0 + $0xe8] sm:$0xff]
  %v45 = vld [vmem:[%s0 + $0xf0] sm:$0xff]
  %v46 = vld [vmem:[%s0 + $0xf8] sm:$0xff]
  %v47 = vld [vmem:[%s0 + $0x100] sm:$0xff]
  %v48 = vld [vmem:[%s0 + $0x108] sm:$0xff]
  %v49 = vld [vmem:[%s0 + $0x110] sm:$0xff]
  %v50 = vld [vmem:[%s0 + $0x118] sm:$0xff]
  %v51 = vld [vmem:[%s0 + $0x120] sm:$0xff]
  %v52 = vld [vmem:[%s0 + $0x128] sm:$0xff]
  %v53 = vld [vmem:[%s0 + $0x130] sm:$0xff]
  %v54 = vld [vmem:[%s0 + $0x138] sm:$0xff]
  %v55 = vld [vmem:[%s0 + $0x140] sm:$0xff]
  %v56 = vld [vmem:[%s0 + $0x148] sm:$0xff]
  %v57 = vld [vmem:[%s0 + $0x150] sm:$0xff]
  %v58 = vld [vmem:[%s0 + $0x158] sm:$0xff]
  %v59 = vld [vmem:[%s0 + $0x160] sm:$0xff]
  %v60 = vld [vmem:[%s0 + $0x168] sm:$0xff]
  %v61 = vld [vmem:[%s0 + $0x170] sm:$0xff]
  %v62 = vld [vmem:[%s0 + $0x178] sm:$0xff]
  %v63 = vld [vmem:[%s0 + $0x180] sm:$0xff]
  %v64 = vld [vmem:[%s0 + $0x188] sm:$0xff]
  %v65 = vld [vmem:[%s0 + $0x190] sm:$0xff]
  %v66 = vld [vmem:[%s0 + $0x198] sm:$0xff]
  %v67 = vld [vmem:[%s0 + $0x1a0] sm:$0xff]
  %v68 = vld [vmem:[%s0 + $0x1a8] sm:$0xff]
  %v69 = vld [vmem:[%s0 + $0x1b0] sm:$0xff]
  %v70 = vld [vmem:[%s0 + $0x1b8] sm:$0xff]
  %v71 = vld [vmem:[%s0 + $0x1c0] sm:$0xff]
  %v72 = vld [vmem:[%s0 + $0x1c8] sm:$0xff]
  %v73 = vld [vmem:[%s0 + $0x1d0] sm:$0xff]
  %v74 = vld [vmem:[%s0 + $0x1d8] sm:$0xff]
  %v75 = vld [vmem:[%s0 + $0x1e0] sm:$0xff]
  %v76 = vld [vmem:[%s0 + $0x1e8] sm:$0xff]
  %v77 = vld [vmem:[%s0 + $0x1f0] sm:$0xff]
  %v78 = vld [vmem:[%s0 + $0x1f8] sm:$0xff]
  %v79 = vld [vmem:[%s1] sm:$0x1]
  %v80 = vlaneseq
  %v81 = vshrl.u32 %v80, 7
  %v82 = vsub.s32 0, %v81
  %v83 = vrot.slane %v79, %v82
  %84 = vset.pattern.permute.xlu0 0
  %85 = vperm.xlu0 %84, %v15
  %v86 = vpop.permute.xlu0 %85
  %87 = vset.pattern.permute.xlu0 0
  %88 = vperm.xlu0 %87, %v16
  %v89 = vpop.permute.xlu0 %88
  %90 = vset.pattern.permute.xlu0 0
  %91 = vperm.xlu0 %90, %v17
  %v92 = vpop.permute.xlu0 %91
  %93 = vset.pattern.permute.xlu0 0
  %94 = vperm.xlu0 %93, %v18
  %v95 = vpop.permute.xlu0 %94
  %96 = vset.pattern.permute.xlu0 0
  %97 = vperm.xlu0 %96, %v19
  %v98 = vpop.permute.xlu0 %97
  %99 = vset.pattern.permute.xlu0 0
  %100 = vperm.xlu0 %99, %v20
  %v101 = vpop.permute.xlu0 %100
  %102 = vset.pattern.permute.xlu0 0
  %103 = vperm.xlu0 %102, %v21
  %v104 = vpop.permute.xlu0 %103
  %105 = vset.pattern.permute.xlu0 0
  %106 = vperm.xlu0 %105, %v22
  %v107 = vpop.permute.xlu0 %106
  %108 = vset.pattern.permute.xlu0 0
  %109 = vperm.xlu0 %108, %v23
  %v110 = vpop.permute.xlu0 %109
  %111 = vset.pattern.permute.xlu0 0
  %112 = vperm.xlu0 %111, %v24
  %v113 = vpop.permute.xlu0 %112
  %114 = vset.pattern.permute.xlu0 0
  %115 = vperm.xlu0 %114, %v25
  %v116 = vpop.permute.xlu0 %115
  %117 = vset.pattern.permute.xlu0 0
  %118 = vperm.xlu0 %117, %v26
  %v119 = vpop.permute.xlu0 %118
  %120 = vset.pattern.permute.xlu0 0
  %121 = vperm.xlu0 %120, %v27
  %v122 = vpop.permute.xlu0 %121
  %123 = vset.pattern.permute.xlu0 0
  %124 = vperm.xlu0 %123, %v28
  %v125 = vpop.permute.xlu0 %124
  %126 = vset.pattern.permute.xlu0 0
  %127 = vperm.xlu0 %126, %v29
  %v128 = vpop.permute.xlu0 %127
  %129 = vset.pattern.permute.xlu0 0
  %130 = vperm.xlu0 %129, %v30
  %v131 = vpop.permute.xlu0 %130
  %132 = vset.pattern.permute.xlu0 0
  %133 = vperm.xlu0 %132, %v31
  %v134 = vpop.permute.xlu0 %133
  %135 = vset.pattern.permute.xlu0 0
  %136 = vperm.xlu0 %135, %v32
  %v137 = vpop.permute.xlu0 %136
  %138 = vset.pattern.permute.xlu0 0
  %139 = vperm.xlu0 %138, %v33
  %v140 = vpop.permute.xlu0 %139
  %141 = vset.pattern.permute.xlu0 0
  %142 = vperm.xlu0 %141, %v34
  %v143 = vpop.permute.xlu0 %142
  %144 = vset.pattern.permute.xlu0 0
  %145 = vperm.xlu0 %144, %v35
  %v146 = vpop.permute.xlu0 %145
  %147 = vset.pattern.permute.xlu0 0
  %148 = vperm.xlu0 %147, %v36
  %v149 = vpop.permute.xlu0 %148
  %150 = vset.pattern.permute.xlu0 0
  %151 = vperm.xlu0 %150, %v37
  %v152 = vpop.permute.xlu0 %151
  %153 = vset.pattern.permute.xlu0 0
  %154 = vperm.xlu0 %153, %v38
  %v155 = vpop.permute.xlu0 %154
  %156 = vset.pattern.permute.xlu0 0
  %157 = vperm.xlu0 %156, %v39
  %v158 = vpop.permute.xlu0 %157
  %159 = vset.pattern.permute.xlu0 0
  %160 = vperm.xlu0 %159, %v40
  %v161 = vpop.permute.xlu0 %160
  %162 = vset.pattern.permute.xlu0 0
  %163 = vperm.xlu0 %162, %v41
  %v164 = vpop.permute.xlu0 %163
  %165 = vset.pattern.permute.xlu0 0
  %166 = vperm.xlu0 %165, %v42
  %v167 = vpop.permute.xlu0 %166
  %168 = vset.pattern.permute.xlu0 0
  %169 = vperm.xlu0 %168, %v43
  %v170 = vpop.permute.xlu0 %169
  %171 = vset.pattern.permute.xlu0 0
  %172 = vperm.xlu0 %171, %v44
  %v173 = vpop.permute.xlu0 %172
  %174 = vset.pattern.permute.xlu0 0
  %175 = vperm.xlu0 %174, %v45
  %v176 = vpop.permute.xlu0 %175
  %177 = vset.pattern.permute.xlu0 0
  %178 = vperm.xlu0 %177, %v46
  %v179 = vpop.permute.xlu0 %178
  %180 = vset.pattern.permute.xlu0 0
  %181 = vperm.xlu0 %180, %v47
  %v182 = vpop.permute.xlu0 %181
  %183 = vset.pattern.permute.xlu0 0
  %184 = vperm.xlu0 %183, %v48
  %v185 = vpop.permute.xlu0 %184
  %186 = vset.pattern.permute.xlu0 0
  %187 = vperm.xlu0 %186, %v49
  %v188 = vpop.permute.xlu0 %187
  %189 = vset.pattern.permute.xlu0 0
  %190 = vperm.xlu0 %189, %v50
  %v191 = vpop.permute.xlu0 %190
  %192 = vset.pattern.permute.xlu0 0
  %193 = vperm.xlu0 %192, %v51
  %v194 = vpop.permute.xlu0 %193
  %195 = vset.pattern.permute.xlu0 0
  %196 = vperm.xlu0 %195, %v52
  %v197 = vpop.permute.xlu0 %196
  %198 = vset.pattern.permute.xlu0 0
  %199 = vperm.xlu0 %198, %v53
  %v200 = vpop.permute.xlu0 %199
  %201 = vset.pattern.permute.xlu0 0
  %202 = vperm.xlu0 %201, %v54
  %v203 = vpop.permute.xlu0 %202
  %204 = vset.pattern.permute.xlu0 0
  %205 = vperm.xlu0 %204, %v55
  %v206 = vpop.permute.xlu0 %205
  %207 = vset.pattern.permute.xlu0 0
  %208 = vperm.xlu0 %207, %v56
  %v209 = vpop.permute.xlu0 %208
  %210 = vset.pattern.permute.xlu0 0
  %211 = vperm.xlu0 %210, %v57
  %v212 = vpop.permute.xlu0 %211
  %213 = vset.pattern.permute.xlu0 0
  %214 = vperm.xlu0 %213, %v58
  %v215 = vpop.permute.xlu0 %214
  %216 = vset.pattern.permute.xlu0 0
  %217 = vperm.xlu0 %216, %v59
  %v218 = vpop.permute.xlu0 %217
  %219 = vset.pattern.permute.xlu0 0
  %220 = vperm.xlu0 %219, %v60
  %v221 = vpop.permute.xlu0 %220
  %222 = vset.pattern.permute.xlu0 0
  %223 = vperm.xlu0 %222, %v61
  %v224 = vpop.permute.xlu0 %223
  %225 = vset.pattern.permute.xlu0 0
  %226 = vperm.xlu0 %225, %v62
  %v227 = vpop.permute.xlu0 %226
  %228 = vset.pattern.permute.xlu0 0
  %229 = vperm.xlu0 %228, %v63
  %v230 = vpop.permute.xlu0 %229
  %231 = vset.pattern.permute.xlu0 0
  %232 = vperm.xlu0 %231, %v64
  %v233 = vpop.permute.xlu0 %232
  %234 = vset.pattern.permute.xlu0 0
  %235 = vperm.xlu0 %234, %v65
  %v236 = vpop.permute.xlu0 %235
  %237 = vset.pattern.permute.xlu0 0
  %238 = vperm.xlu0 %237, %v66
  %v239 = vpop.permute.xlu0 %238
  %240 = vset.pattern.permute.xlu0 0
  %241 = vperm.xlu0 %240, %v67
  %v242 = vpop.permute.xlu0 %241
  %243 = vset.pattern.permute.xlu0 0
  %244 = vperm.xlu0 %243, %v68
  %v245 = vpop.permute.xlu0 %244
  %246 = vset.pattern.permute.xlu0 0
  %247 = vperm.xlu0 %246, %v69
  %v248 = vpop.permute.xlu0 %247
  %249 = vset.pattern.permute.xlu0 0
  %250 = vperm.xlu0 %249, %v70
  %v251 = vpop.permute.xlu0 %250
  %252 = vset.pattern.permute.xlu0 0
  %253 = vperm.xlu0 %252, %v71
  %v254 = vpop.permute.xlu0 %253
  %255 = vset.pattern.permute.xlu0 0
  %256 = vperm.xlu0 %255, %v72
  %v257 = vpop.permute.xlu0 %256
  %258 = vset.pattern.permute.xlu0 0
  %259 = vperm.xlu0 %258, %v73
  %v260 = vpop.permute.xlu0 %259
  %261 = vset.pattern.permute.xlu0 0
  %262 = vperm.xlu0 %261, %v74
  %v263 = vpop.permute.xlu0 %262
  %264 = vset.pattern.permute.xlu0 0
  %265 = vperm.xlu0 %264, %v75
  %v266 = vpop.permute.xlu0 %265
  %267 = vset.pattern.permute.xlu0 0
  %268 = vperm.xlu0 %267, %v76
  %v269 = vpop.permute.xlu0 %268
  %270 = vset.pattern.permute.xlu0 0
  %271 = vperm.xlu0 %270, %v77
  %v272 = vpop.permute.xlu0 %271
  %273 = vset.pattern.permute.xlu0 0
  %274 = vperm.xlu0 %273, %v78
  %v275 = vpop.permute.xlu0 %274
  %vm276 = vcmp.eq.s32.totalorder %v83, %v86
  %vm277 = vcmp.eq.s32.totalorder %v83, %v89
  %vm278 = vcmp.eq.s32.totalorder %v83, %v92
  %vm279 = vcmp.eq.s32.totalorder %v83, %v95
  %vm280 = vcmp.eq.s32.totalorder %v83, %v98
  %vm281 = vcmp.eq.s32.totalorder %v83, %v101
  %vm282 = vcmp.eq.s32.totalorder %v83, %v104
  %vm283 = vcmp.eq.s32.totalorder %v83, %v107
  %vm284 = vcmp.eq.s32.totalorder %v83, %v110
  %vm285 = vcmp.eq.s32.totalorder %v83, %v113
  %vm286 = vcmp.eq.s32.totalorder %v83, %v116
  %vm287 = vcmp.eq.s32.totalorder %v83, %v119
  %vm288 = vcmp.eq.s32.totalorder %v83, %v122
  %vm289 = vcmp.eq.s32.totalorder %v83, %v125
  %vm290 = vcmp.eq.s32.totalorder %v83, %v128
  %vm291 = vcmp.eq.s32.totalorder %v83, %v131
  %vm292 = vcmp.eq.s32.totalorder %v83, %v134
  %vm293 = vcmp.eq.s32.totalorder %v83, %v137
  %vm294 = vcmp.eq.s32.totalorder %v83, %v140
  %vm295 = vcmp.eq.s32.totalorder %v83, %v143
  %vm296 = vcmp.eq.s32.totalorder %v83, %v146
  %vm297 = vcmp.eq.s32.totalorder %v83, %v149
  %vm298 = vcmp.eq.s32.totalorder %v83, %v152
  %vm299 = vcmp.eq.s32.totalorder %v83, %v155
  %vm300 = vcmp.eq.s32.totalorder %v83, %v158
  %vm301 = vcmp.eq.s32.totalorder %v83, %v161
  %vm302 = vcmp.eq.s32.totalorder %v83, %v164
  %vm303 = vcmp.eq.s32.totalorder %v83, %v167
  %vm304 = vcmp.eq.s32.totalorder %v83, %v170
  %vm305 = vcmp.eq.s32.totalorder %v83, %v173
  %vm306 = vcmp.eq.s32.totalorder %v83, %v176
  %vm307 = vcmp.eq.s32.totalorder %v83, %v179
  %vm308 = vcmp.eq.s32.totalorder %v83, %v182
  %vm309 = vcmp.eq.s32.totalorder %v83, %v185
  %vm310 = vcmp.eq.s32.totalorder %v83, %v188
  %vm311 = vcmp.eq.s32.totalorder %v83, %v191
  %vm312 = vcmp.eq.s32.totalorder %v83, %v194
  %vm313 = vcmp.eq.s32.totalorder %v83, %v197
  %vm314 = vcmp.eq.s32.totalorder %v83, %v200
  %vm315 = vcmp.eq.s32.totalorder %v83, %v203
  %vm316 = vcmp.eq.s32.totalorder %v83, %v206
  %vm317 = vcmp.eq.s32.totalorder %v83, %v209
  %vm318 = vcmp.eq.s32.totalorder %v83, %v212
  %vm319 = vcmp.eq.s32.totalorder %v83, %v215
  %vm320 = vcmp.eq.s32.totalorder %v83, %v218
  %vm321 = vcmp.eq.s32.totalorder %v83, %v221
  %vm322 = vcmp.eq.s32.totalorder %v83, %v224
  %vm323 = vcmp.eq.s32.totalorder %v83, %v227
  %vm324 = vcmp.eq.s32.totalorder %v83, %v230
  %vm325 = vcmp.eq.s32.totalorder %v83, %v233
  %vm326 = vcmp.eq.s32.totalorder %v83, %v236
  %vm327 = vcmp.eq.s32.totalorder %v83, %v239
  %vm328 = vcmp.eq.s32.totalorder %v83, %v242
  %vm329 = vcmp.eq.s32.totalorder %v83, %v245
  %vm330 = vcmp.eq.s32.totalorder %v83, %v248
  %vm331 = vcmp.eq.s32.totalorder %v83, %v251
  %vm332 = vcmp.eq.s32.totalorder %v83, %v254
  %vm333 = vcmp.eq.s32.totalorder %v83, %v257
  %vm334 = vcmp.eq.s32.totalorder %v83, %v260
  %vm335 = vcmp.eq.s32.totalorder %v83, %v263
  %vm336 = vcmp.eq.s32.totalorder %v83, %v266
  %vm337 = vcmp.eq.s32.totalorder %v83, %v269
  %vm338 = vcmp.eq.s32.totalorder %v83, %v272
  %vm339 = vcmp.eq.s32.totalorder %v83, %v275
  %v340 = vsel %vm276, 1, 0
  %v341 = vsel %vm277, 1, 0
  %v342 = vsel %vm278, 1, 0
  %v343 = vsel %vm279, 1, 0
  %v344 = vsel %vm280, 1, 0
  %v345 = vsel %vm281, 1, 0
  %v346 = vsel %vm282, 1, 0
  %v347 = vsel %vm283, 1, 0
  %v348 = vsel %vm284, 1, 0
  %v349 = vsel %vm285, 1, 0
  %v350 = vsel %vm286, 1, 0
  %v351 = vsel %vm287, 1, 0
  %v352 = vsel %vm288, 1, 0
  %v353 = vsel %vm289, 1, 0
  %v354 = vsel %vm290, 1, 0
  %v355 = vsel %vm291, 1, 0
  %v356 = vsel %vm292, 1, 0
  %v357 = vsel %vm293, 1, 0
  %v358 = vsel %vm294, 1, 0
  %v359 = vsel %vm295, 1, 0
  %v360 = vsel %vm296, 1, 0
  %v361 = vsel %vm297, 1, 0
  %v362 = vsel %vm298, 1, 0
  %v363 = vsel %vm299, 1, 0
  %v364 = vsel %vm300, 1, 0
  %v365 = vsel %vm301, 1, 0
  %v366 = vsel %vm302, 1, 0
  %v367 = vsel %vm303, 1, 0
  %v368 = vsel %vm304, 1, 0
  %v369 = vsel %vm305, 1, 0
  %v370 = vsel %vm306, 1, 0
  %v371 = vsel %vm307, 1, 0
  %v372 = vsel %vm308, 1, 0
  %v373 = vsel %vm309, 1, 0
  %v374 = vsel %vm310, 1, 0
  %v375 = vsel %vm311, 1, 0
  %v376 = vsel %vm312, 1, 0
  %v377 = vsel %vm313, 1, 0
  %v378 = vsel %vm314, 1, 0
  %v379 = vsel %vm315, 1, 0
  %v380 = vsel %vm316, 1, 0
  %v381 = vsel %vm317, 1, 0
  %v382 = vsel %vm318, 1, 0
  %v383 = vsel %vm319, 1, 0
  %v384 = vsel %vm320, 1, 0
  %v385 = vsel %vm321, 1, 0
  %v386 = vsel %vm322, 1, 0
  %v387 = vsel %vm323, 1, 0
  %v388 = vsel %vm324, 1, 0
  %v389 = vsel %vm325, 1, 0
  %v390 = vsel %vm326, 1, 0
  %v391 = vsel %vm327, 1, 0
  %v392 = vsel %vm328, 1, 0
  %v393 = vsel %vm329, 1, 0
  %v394 = vsel %vm330, 1, 0
  %v395 = vsel %vm331, 1, 0
  %v396 = vsel %vm332, 1, 0
  %v397 = vsel %vm333, 1, 0
  %v398 = vsel %vm334, 1, 0
  %v399 = vsel %vm335, 1, 0
  %v400 = vsel %vm336, 1, 0
  %v401 = vsel %vm337, 1, 0
  %v402 = vsel %vm338, 1, 0
  %v403 = vsel %vm339, 1, 0
  %v404 = vcvt.s32.f32 %v340
  %v405 = vcvt.s32.f32 %v341
  %v406 = vcvt.s32.f32 %v342
  %v407 = vcvt.s32.f32 %v343
  %v408 = vcvt.s32.f32 %v344
  %v409 = vcvt.s32.f32 %v345
  %v410 = vcvt.s32.f32 %v346
  %v411 = vcvt.s32.f32 %v347
  %v412 = vcvt.s32.f32 %v348
  %v413 = vcvt.s32.f32 %v349
  %v414 = vcvt.s32.f32 %v350
  %v415 = vcvt.s32.f32 %v351
  %v416 = vcvt.s32.f32 %v352
  %v417 = vcvt.s32.f32 %v353
  %v418 = vcvt.s32.f32 %v354
  %v419 = vcvt.s32.f32 %v355
  %v420 = vcvt.s32.f32 %v356
  %v421 = vcvt.s32.f32 %v357
  %v422 = vcvt.s32.f32 %v358
  %v423 = vcvt.s32.f32 %v359
  %v424 = vcvt.s32.f32 %v360
  %v425 = vcvt.s32.f32 %v361
  %v426 = vcvt.s32.f32 %v362
  %v427 = vcvt.s32.f32 %v363
  %v428 = vcvt.s32.f32 %v364
  %v429 = vcvt.s32.f32 %v365
  %v430 = vcvt.s32.f32 %v366
  %v431 = vcvt.s32.f32 %v367
  %v432 = vcvt.s32.f32 %v368
  %v433 = vcvt.s32.f32 %v369
  %v434 = vcvt.s32.f32 %v370
  %v435 = vcvt.s32.f32 %v371
  %v436 = vcvt.s32.f32 %v372
  %v437 = vcvt.s32.f32 %v373
  %v438 = vcvt.s32.f32 %v374
  %v439 = vcvt.s32.f32 %v375
  %v440 = vcvt.s32.f32 %v376
  %v441 = vcvt.s32.f32 %v377
  %v442 = vcvt.s32.f32 %v378
  %v443 = vcvt.s32.f32 %v379
  %v444 = vcvt.s32.f32 %v380
  %v445 = vcvt.s32.f32 %v381
  %v446 = vcvt.s32.f32 %v382
  %v447 = vcvt.s32.f32 %v383
  %v448 = vcvt.s32.f32 %v384
  %v449 = vcvt.s32.f32 %v385
  %v450 = vcvt.s32.f32 %v386
  %v451 = vcvt.s32.f32 %v387
  %v452 = vcvt.s32.f32 %v388
  %v453 = vcvt.s32.f32 %v389
  %v454 = vcvt.s32.f32 %v390
  %v455 = vcvt.s32.f32 %v391
  %v456 = vcvt.s32.f32 %v392
  %v457 = vcvt.s32.f32 %v393
  %v458 = vcvt.s32.f32 %v394
  %v459 = vcvt.s32.f32 %v395
  %v460 = vcvt.s32.f32 %v396
  %v461 = vcvt.s32.f32 %v397
  %v462 = vcvt.s32.f32 %v398
  %v463 = vcvt.s32.f32 %v399
  %v464 = vcvt.s32.f32 %v400
  %v465 = vcvt.s32.f32 %v401
  %v466 = vcvt.s32.f32 %v402
  %v467 = vcvt.s32.f32 %v403
  %v468 = vpack.c.bf16 %v405, %v404
  %v469 = vpack.c.bf16 %v407, %v406
  %v470 = vpack.c.bf16 %v409, %v408
  %v471 = vpack.c.bf16 %v411, %v410
  %v472 = vpack.c.bf16 %v413, %v412
  %v473 = vpack.c.bf16 %v415, %v414
  %v474 = vpack.c.bf16 %v417, %v416
  %v475 = vpack.c.bf16 %v419, %v418
  %v476 = vpack.c.bf16 %v421, %v420
  %v477 = vpack.c.bf16 %v423, %v422
  %v478 = vpack.c.bf16 %v425, %v424
  %v479 = vpack.c.bf16 %v427, %v426
  %v480 = vpack.c.bf16 %v429, %v428
  %v481 = vpack.c.bf16 %v431, %v430
  %v482 = vpack.c.bf16 %v433, %v432
  %v483 = vpack.c.bf16 %v435, %v434
  %v484 = vpack.c.bf16 %v437, %v436
  %v485 = vpack.c.bf16 %v439, %v438
  %v486 = vpack.c.bf16 %v441, %v440
  %v487 = vpack.c.bf16 %v443, %v442
  %v488 = vpack.c.bf16 %v445, %v444
  %v489 = vpack.c.bf16 %v447, %v446
  %v490 = vpack.c.bf16 %v449, %v448
  %v491 = vpack.c.bf16 %v451, %v450
  %v492 = vpack.c.bf16 %v453, %v452
  %v493 = vpack.c.bf16 %v455, %v454
  %v494 = vpack.c.bf16 %v457, %v456
  %v495 = vpack.c.bf16 %v459, %v458
  %v496 = vpack.c.bf16 %v461, %v460
  %v497 = vpack.c.bf16 %v463, %v462
  %v498 = vpack.c.bf16 %v465, %v464
  %v499 = vpack.c.bf16 %v467, %v466
  %v500 = vld [vmem:[%s2] sm:$0xf]
  %v501 = vld [vmem:[%s2 + $0x4] sm:$0xf]
  %v502 = vld [vmem:[%s2 + $0x8] sm:$0xf]
  %v503 = vld [vmem:[%s2 + $0xc] sm:$0xf]
  %v504 = vld [vmem:[%s2 + $0x10] sm:$0xf]
  %v505 = vld [vmem:[%s2 + $0x14] sm:$0xf]
  %v506 = vld [vmem:[%s2 + $0x18] sm:$0xf]
  %v507 = vld [vmem:[%s2 + $0x1c] sm:$0xf]
  %v508 = vld [vmem:[%s2 + $0x20] sm:$0xf]
  %v509 = vld [vmem:[%s2 + $0x24] sm:$0xf]
  %v510 = vld [vmem:[%s2 + $0x28] sm:$0xf]
  %v511 = vld [vmem:[%s2 + $0x2c] sm:$0xf]
  %v512 = vld [vmem:[%s2 + $0x30] sm:$0xf]
  %v513 = vld [vmem:[%s2 + $0x34] sm:$0xf]
  %v514 = vld [vmem:[%s2 + $0x38] sm:$0xf]
  %v515 = vld [vmem:[%s2 + $0x3c] sm:$0xf]
  %v532 = vunpack.c.l.b16 %v500
  %v533 = vunpack.c.l.b16 %v501
  %v534 = vunpack.c.l.b16 %v502
  %v535 = vunpack.c.l.b16 %v503
  %v536 = vunpack.c.l.b16 %v504
  %v537 = vunpack.c.l.b16 %v505
  %v538 = vunpack.c.l.b16 %v506
  %v539 = vunpack.c.l.b16 %v507
  %v540 = vunpack.c.l.b16 %v508
  %v541 = vunpack.c.l.b16 %v509
  %v542 = vunpack.c.l.b16 %v510
  %v543 = vunpack.c.l.b16 %v511
  %v544 = vunpack.c.l.b16 %v512
  %v545 = vunpack.c.l.b16 %v513
  %v546 = vunpack.c.l.b16 %v514
  %v547 = vunpack.c.l.b16 %v515
  %v548 = vpack.c.b16 %v533, %v532
  %v549 = vpack.c.b16 %v535, %v534
  %v550 = vpack.c.b16 %v537, %v536
  %v551 = vpack.c.b16 %v539, %v538
  %v552 = vpack.c.b16 %v541, %v540
  %v553 = vpack.c.b16 %v543, %v542
  %v554 = vpack.c.b16 %v545, %v544
  %v555 = vpack.c.b16 %v547, %v546
  %564 = vmatprep.subr.bf16.mxu0 0
  %565 = vmatpush1.bf16.msra.mxu0 %v548
  %566 = vmatprep.subr.bf16.mxu0 0
  %567 = vmatpush1.bf16.msra.mxu0 %v549
  %568 = vmatprep.subr.bf16.mxu0 0
  %569 = vmatpush1.bf16.msra.mxu0 %v550
  %570 = vmatprep.subr.bf16.mxu0 0
  %571 = vmatpush1.bf16.msra.mxu0 %v551
  %572 = vmatprep.subr.bf16.mxu0 0
  %573 = vmatpush1.bf16.msra.mxu0 %v552
  %574 = vmatprep.subr.bf16.mxu0 0
  %575 = vmatpush1.bf16.msra.mxu0 %v553
  %576 = vmatprep.subr.bf16.mxu0 0
  %577 = vmatpush1.bf16.msra.mxu0 %v554
  %578 = vmatprep.subr.bf16.mxu0 0
  %579 = vmatpush1.bf16.msra.mxu0 %v555
  %580 = vmatprep.subr.bf16.mxu0 0
  %581 = vmatpush1.bf16.msra.mxu0 0
  %582 = vmatprep.subr.bf16.mxu0 0
  %583 = vmatpush1.bf16.msra.mxu0 0
  %584 = vmatprep.subr.bf16.mxu0 0
  %585 = vmatpush1.bf16.msra.mxu0 0
  %586 = vmatprep.subr.bf16.mxu0 0
  %587 = vmatpush1.bf16.msra.mxu0 0
  %588 = vmatprep.subr.bf16.mxu0 0
  %589 = vmatpush1.bf16.msra.mxu0 0
  %590 = vmatprep.subr.bf16.mxu0 0
  %591 = vmatpush1.bf16.msra.mxu0 0
  %592 = vmatprep.subr.bf16.mxu0 0
  %593 = vmatpush1.bf16.msra.mxu0 0
  %594 = vmatprep.subr.bf16.mxu0 0
  %595 = vmatpush1.bf16.msra.mxu0 0
  %596 = vmatprep.mubr.bf16.mxu0 0
  %597 = vmatmul.mubr.bf16.gmra.mrb[0].mxu0 %v468
  %v598 = vpop.f32.mrb[0].mxu0
  %v599 = vadd.f32 0.0, %v598
  %v600 = vpop.f32.mrb[0].mxu0
  %v601 = vpop.f32.mrb[0].mxu0
  %v602 = vadd.f32 0.0, %v601
  %v603 = vpop.f32.mrb[0].mxu0
  %604 = vmatprep.mubr.bf16.mxu0 0
  %605 = vmatmul.mubr.bf16.gmra.mrb[0].mxu0 %v469
  %v606 = vpop.f32.mrb[0].mxu0
  %v607 = vadd.f32 0.0, %v606
  %v608 = vpop.f32.mrb[0].mxu0
  %v609 = vpop.f32.mrb[0].mxu0
  %v610 = vadd.f32 0.0, %v609
  %v611 = vpop.f32.mrb[0].mxu0
  %612 = vmatprep.mubr.bf16.mxu0 0
  %613 = vmatmul.mubr.bf16.gmra.mrb[0].mxu0 %v470
  %v614 = vpop.f32.mrb[0].mxu0
  %v615 = vadd.f32 0.0, %v614
  %v616 = vpop.f32.mrb[0].mxu0
  %v617 = vpop.f32.mrb[0].mxu0
  %v618 = vadd.f32 0.0, %v617
  %v619 = vpop.f32.mrb[0].mxu0
  %620 = vmatprep.mubr.bf16.mxu0 0
  %621 = vmatmul.mubr.bf16.gmra.mrb[0].mxu0 %v471
  %v622 = vpop.f32.mrb[0].mxu0
  %v623 = vadd.f32 0.0, %v622
  %v624 = vpop.f32.mrb[0].mxu0
  %v625 = vpop.f32.mrb[0].mxu0
  %v626 = vadd.f32 0.0, %v625
  %v627 = vpop.f32.mrb[0].mxu0
  %628 = vmatprep.mubr.bf16.mxu0 0
  %629 = vmatmul.mubr.bf16.gmra.mrb[0].mxu0 %v472
  %v630 = vpop.f32.mrb[0].mxu0
  %v631 = vadd.f32 0.0, %v630
  %v632 = vpop.f32.mrb[0].mxu0
  %v633 = vpop.f32.mrb[0].mxu0
  %v634 = vadd.f32 0.0, %v633
  %v635 = vpop.f32.mrb[0].mxu0
  %636 = vmatprep.mubr.bf16.mxu0 0
  %637 = vmatmul.mubr.bf16.gmra.mrb[0].mxu0 %v473
  %v638 = vpop.f32.mrb[0].mxu0
  %v639 = vadd.f32 0.0, %v638
  %v640 = vpop.f32.mrb[0].mxu0
  %v641 = vpop.f32.mrb[0].mxu0
  %v642 = vadd.f32 0.0, %v641
  %v643 = vpop.f32.mrb[0].mxu0
  %644 = vmatprep.mubr.bf16.mxu0 0
  %645 = vmatmul.mubr.bf16.gmra.mrb[0].mxu0 %v474
  %v646 = vpop.f32.mrb[0].mxu0
  %v647 = vadd.f32 0.0, %v646
  %v648 = vpop.f32.mrb[0].mxu0
  %v649 = vpop.f32.mrb[0].mxu0
  %v650 = vadd.f32 0.0, %v649
  %v651 = vpop.f32.mrb[0].mxu0
  %652 = vmatprep.mubr.bf16.mxu0 0
  %653 = vmatmul.mubr.bf16.gmra.mrb[0].mxu0 %v475
  %v654 = vpop.f32.mrb[0].mxu0
  %v655 = vadd.f32 0.0, %v654
  %v656 = vpop.f32.mrb[0].mxu0
  %v657 = vpop.f32.mrb[0].mxu0
  %v658 = vadd.f32 0.0, %v657
  %v659 = vpop.f32.mrb[0].mxu0
  %660 = vmatprep.mubr.bf16.mxu0 0
  %661 = vmatmul.mubr.bf16.gmra.mrb[0].mxu0 %v476
  %v662 = vpop.f32.mrb[0].mxu0
  %v663 = vadd.f32 0.0, %v662
  %v664 = vpop.f32.mrb[0].mxu0
  %v665 = vpop.f32.mrb[0].mxu0
  %v666 = vadd.f32 0.0, %v665
  %v667 = vpop.f32.mrb[0].mxu0
  %668 = vmatprep.mubr.bf16.mxu0 0
  %669 = vmatmul.mubr.bf16.gmra.mrb[0].mxu0 %v477
  %v670 = vpop.f32.mrb[0].mxu0
  %v671 = vadd.f32 0.0, %v670
  %v672 = vpop.f32.mrb[0].mxu0
  %v673 = vpop.f32.mrb[0].mxu0
  %v674 = vadd.f32 0.0, %v673
  %v675 = vpop.f32.mrb[0].mxu0
  %676 = vmatprep.mubr.bf16.mxu0 0
  %677 = vmatmul.mubr.bf16.gmra.mrb[0].mxu0 %v478
  %v678 = vpop.f32.mrb[0].mxu0
  %v679 = vadd.f32 0.0, %v678
  %v680 = vpop.f32.mrb[0].mxu0
  %v681 = vpop.f32.mrb[0].mxu0
  %v682 = vadd.f32 0.0, %v681
  %v683 = vpop.f32.mrb[0].mxu0
  %684 = vmatprep.mubr.bf16.mxu0 0
  %685 = vmatmul.mubr.bf16.gmra.mrb[0].mxu0 %v479
  %v686 = vpop.f32.mrb[0].mxu0
  %v687 = vadd.f32 0.0, %v686
  %v688 = vpop.f32.mrb[0].mxu0
  %v689 = vpop.f32.mrb[0].mxu0
  %v690 = vadd.f32 0.0, %v689
  %v691 = vpop.f32.mrb[0].mxu0
  %692 = vmatprep.mubr.bf16.mxu0 0
  %693 = vmatmul.mubr.bf16.gmra.mrb[0].mxu0 %v480
  %v694 = vpop.f32.mrb[0].mxu0
  %v695 = vadd.f32 0.0, %v694
  %v696 = vpop.f32.mrb[0].mxu0
  %v697 = vpop.f32.mrb[0].mxu0
  %v698 = vadd.f32 0.0, %v697
  %v699 = vpop.f32.mrb[0].mxu0
  %700 = vmatprep.mubr.bf16.mxu0 0
  %701 = vmatmul.mubr.bf16.gmra.mrb[0].mxu0 %v481
  %v702 = vpop.f32.mrb[0].mxu0
  %v703 = vadd.f32 0.0, %v702
  %v704 = vpop.f32.mrb[0].mxu0
  %v705 = vpop.f32.mrb[0].mxu0
  %v706 = vadd.f32 0.0, %v705
  %v707 = vpop.f32.mrb[0].mxu0
  %708 = vmatprep.mubr.bf16.mxu0 0
  %709 = vmatmul.mubr.bf16.gmra.mrb[0].mxu0 %v482
  %v710 = vpop.f32.mrb[0].mxu0
  %v711 = vadd.f32 0.0, %v710
  %v712 = vpop.f32.mrb[0].mxu0
  %v713 = vpop.f32.mrb[0].mxu0
  %v714 = vadd.f32 0.0, %v713
  %v715 = vpop.f32.mrb[0].mxu0
  %716 = vmatprep.mubr.bf16.mxu0 0
  %717 = vmatmul.mubr.bf16.gmra.mrb[0].mxu0 %v483
  %v718 = vpop.f32.mrb[0].mxu0
  %v719 = vadd.f32 0.0, %v718
  %v720 = vpop.f32.mrb[0].mxu0
  %v721 = vpop.f32.mrb[0].mxu0
  %v722 = vadd.f32 0.0, %v721
  %v723 = vpop.f32.mrb[0].mxu0
  %724 = vmatprep.mubr.bf16.mxu0 0
  %725 = vmatmul.mubr.bf16.gmra.mrb[0].mxu0 %v484
  %v726 = vpop.f32.mrb[0].mxu0
  %v727 = vadd.f32 0.0, %v726
  %v728 = vpop.f32.mrb[0].mxu0
  %v729 = vpop.f32.mrb[0].mxu0
  %v730 = vadd.f32 0.0, %v729
  %v731 = vpop.f32.mrb[0].mxu0
  %732 = vmatprep.mubr.bf16.mxu0 0
  %733 = vmatmul.mubr.bf16.gmra.mrb[0].mxu0 %v485
  %v734 = vpop.f32.mrb[0].mxu0
  %v735 = vadd.f32 0.0, %v734
  %v736 = vpop.f32.mrb[0].mxu0
  %v737 = vpop.f32.mrb[0].mxu0
  %v738 = vadd.f32 0.0, %v737
  %v739 = vpop.f32.mrb[0].mxu0
  %740 = vmatprep.mubr.bf16.mxu0 0
  %741 = vmatmul.mubr.bf16.gmra.mrb[0].mxu0 %v486
  %v742 = vpop.f32.mrb[0].mxu0
  %v743 = vadd.f32 0.0, %v742
  %v744 = vpop.f32.mrb[0].mxu0
  %v745 = vpop.f32.mrb[0].mxu0
  %v746 = vadd.f32 0.0, %v745
  %v747 = vpop.f32.mrb[0].mxu0
  %748 = vmatprep.mubr.bf16.mxu0 0
  %749 = vmatmul.mubr.bf16.gmra.mrb[0].mxu0 %v487
  %v750 = vpop.f32.mrb[0].mxu0
  %v751 = vadd.f32 0.0, %v750
  %v752 = vpop.f32.mrb[0].mxu0
  %v753 = vpop.f32.mrb[0].mxu0
  %v754 = vadd.f32 0.0, %v753
  %v755 = vpop.f32.mrb[0].mxu0
  %756 = vmatprep.mubr.bf16.mxu0 0
  %757 = vmatmul.mubr.bf16.gmra.mrb[0].mxu0 %v488
  %v758 = vpop.f32.mrb[0].mxu0
  %v759 = vadd.f32 0.0, %v758
  %v760 = vpop.f32.mrb[0].mxu0
  %v761 = vpop.f32.mrb[0].mxu0
  %v762 = vadd.f32 0.0, %v761
  %v763 = vpop.f32.mrb[0].mxu0
  %764 = vmatprep.mubr.bf16.mxu0 0
  %765 = vmatmul.mubr.bf16.gmra.mrb[0].mxu0 %v489
  %v766 = vpop.f32.mrb[0].mxu0
  %v767 = vadd.f32 0.0, %v766
  %v768 = vpop.f32.mrb[0].mxu0
  %v769 = vpop.f32.mrb[0].mxu0
  %v770 = vadd.f32 0.0, %v769
  %v771 = vpop.f32.mrb[0].mxu0
  %772 = vmatprep.mubr.bf16.mxu0 0
  %773 = vmatmul.mubr.bf16.gmra.mrb[0].mxu0 %v490
  %v774 = vpop.f32.mrb[0].mxu0
  %v775 = vadd.f32 0.0, %v774
  %v776 = vpop.f32.mrb[0].mxu0
  %v777 = vpop.f32.mrb[0].mxu0
  %v778 = vadd.f32 0.0, %v777
  %v779 = vpop.f32.mrb[0].mxu0
  %780 = vmatprep.mubr.bf16.mxu0 0
  %781 = vmatmul.mubr.bf16.gmra.mrb[0].mxu0 %v491
  %v782 = vpop.f32.mrb[0].mxu0
  %v783 = vadd.f32 0.0, %v782
  %v784 = vpop.f32.mrb[0].mxu0
  %v785 = vpop.f32.mrb[0].mxu0
  %v786 = vadd.f32 0.0, %v785
  %v787 = vpop.f32.mrb[0].mxu0
  %788 = vmatprep.mubr.bf16.mxu0 0
  %789 = vmatmul.mubr.bf16.gmra.mrb[0].mxu0 %v492
  %v790 = vpop.f32.mrb[0].mxu0
  %v791 = vadd.f32 0.0, %v790
  %v792 = vpop.f32.mrb[0].mxu0
  %v793 = vpop.f32.mrb[0].mxu0
  %v794 = vadd.f32 0.0, %v793
  %v795 = vpop.f32.mrb[0].mxu0
  %796 = vmatprep.mubr.bf16.mxu0 0
  %797 = vmatmul.mubr.bf16.gmra.mrb[0].mxu0 %v493
  %v798 = vpop.f32.mrb[0].mxu0
  %v799 = vadd.f32 0.0, %v798
  %v800 = vpop.f32.mrb[0].mxu0
  %v801 = vpop.f32.mrb[0].mxu0
  %v802 = vadd.f32 0.0, %v801
  %v803 = vpop.f32.mrb[0].mxu0
  %804 = vmatprep.mubr.bf16.mxu0 0
  %805 = vmatmul.mubr.bf16.gmra.mrb[0].mxu0 %v494
  %v806 = vpop.f32.mrb[0].mxu0
  %v807 = vadd.f32 0.0, %v806
  %v808 = vpop.f32.mrb[0].mxu0
  %v809 = vpop.f32.mrb[0].mxu0
  %v810 = vadd.f32 0.0, %v809
  %v811 = vpop.f32.mrb[0].mxu0
  %812 = vmatprep.mubr.bf16.mxu0 0
  %813 = vmatmul.mubr.bf16.gmra.mrb[0].mxu0 %v495
  %v814 = vpop.f32.mrb[0].mxu0
  %v815 = vadd.f32 0.0, %v814
  %v816 = vpop.f32.mrb[0].mxu0
  %v817 = vpop.f32.mrb[0].mxu0
  %v818 = vadd.f32 0.0, %v817
  %v819 = vpop.f32.mrb[0].mxu0
  %820 = vmatprep.mubr.bf16.mxu0 0
  %821 = vmatmul.mubr.bf16.gmra.mrb[0].mxu0 %v496
  %v822 = vpop.f32.mrb[0].mxu0
  %v823 = vadd.f32 0.0, %v822
  %v824 = vpop.f32.mrb[0].mxu0
  %v825 = vpop.f32.mrb[0].mxu0
  %v826 = vadd.f32 0.0, %v825
  %v827 = vpop.f32.mrb[0].mxu0
  %828 = vmatprep.mubr.bf16.mxu0 0
  %829 = vmatmul.mubr.bf16.gmra.mrb[0].mxu0 %v497
  %v830 = vpop.f32.mrb[0].mxu0
  %v831 = vadd.f32 0.0, %v830
  %v832 = vpop.f32.mrb[0].mxu0
  %v833 = vpop.f32.mrb[0].mxu0
  %v834 = vadd.f32 0.0, %v833
  %v835 = vpop.f32.mrb[0].mxu0
  %836 = vmatprep.mubr.bf16.mxu0 0
  %837 = vmatmul.mubr.bf16.gmra.mrb[0].mxu0 %v498
  %v838 = vpop.f32.mrb[0].mxu0
  %v839 = vadd.f32 0.0, %v838
  %v840 = vpop.f32.mrb[0].mxu0
  %v841 = vpop.f32.mrb[0].mxu0
  %v842 = vadd.f32 0.0, %v841
  %v843 = vpop.f32.mrb[0].mxu0
  %844 = vmatprep.mubr.bf16.mxu0 0
  %845 = vmatmul.mubr.bf16.gmra.mrb[0].mxu0 %v499
  %v846 = vpop.f32.mrb[0].mxu0
  %v847 = vadd.f32 0.0, %v846
  %v848 = vpop.f32.mrb[0].mxu0
  %v849 = vpop.f32.mrb[0].mxu0
  %v850 = vadd.f32 0.0, %v849
  %v851 = vpop.f32.mrb[0].mxu0
  %852 = vdwg.mxu0
  %v853 = vmul.f32 %v599, %v599
  %v854 = vmul.f32 %v602, %v602
  %v855 = vmul.f32 %v607, %v607
  %v856 = vmul.f32 %v610, %v610
  %v857 = vmul.f32 %v615, %v615
  %v858 = vmul.f32 %v618, %v618
  %v859 = vmul.f32 %v623, %v623
  %v860 = vmul.f32 %v626, %v626
  %v861 = vmul.f32 %v631, %v631
  %v862 = vmul.f32 %v634, %v634
  %v863 = vmul.f32 %v639, %v639
  %v864 = vmul.f32 %v642, %v642
  %v865 = vmul.f32 %v647, %v647
  %v866 = vmul.f32 %v650, %v650
  %v867 = vmul.f32 %v655, %v655
  %v868 = vmul.f32 %v658, %v658
  %v869 = vmul.f32 %v663, %v663
  %v870 = vmul.f32 %v666, %v666
  %v871 = vmul.f32 %v671, %v671
  %v872 = vmul.f32 %v674, %v674
  %v873 = vmul.f32 %v679, %v679
  %v874 = vmul.f32 %v682, %v682
  %v875 = vmul.f32 %v687, %v687
  %v876 = vmul.f32 %v690, %v690
  %v877 = vmul.f32 %v695, %v695
  %v878 = vmul.f32 %v698, %v698
  %v879 = vmul.f32 %v703, %v703
  %v880 = vmul.f32 %v706, %v706
  %v881 = vmul.f32 %v711, %v711
  %v882 = vmul.f32 %v714, %v714
  %v883 = vmul.f32 %v719, %v719
  %v884 = vmul.f32 %v722, %v722
  %v885 = vmul.f32 %v727, %v727
  %v886 = vmul.f32 %v730, %v730
  %v887 = vmul.f32 %v735, %v735
  %v888 = vmul.f32 %v738, %v738
  %v889 = vmul.f32 %v743, %v743
  %v890 = vmul.f32 %v746, %v746
  %v891 = vmul.f32 %v751, %v751
  %v892 = vmul.f32 %v754, %v754
  %v893 = vmul.f32 %v759, %v759
  %v894 = vmul.f32 %v762, %v762
  %v895 = vmul.f32 %v767, %v767
  %v896 = vmul.f32 %v770, %v770
  %v897 = vmul.f32 %v775, %v775
  %v898 = vmul.f32 %v778, %v778
  %v899 = vmul.f32 %v783, %v783
  %v900 = vmul.f32 %v786, %v786
  %v901 = vmul.f32 %v791, %v791
  %v902 = vmul.f32 %v794, %v794
  %v903 = vmul.f32 %v799, %v799
  %v904 = vmul.f32 %v802, %v802
  %v905 = vmul.f32 %v807, %v807
  %v906 = vmul.f32 %v810, %v810
  %v907 = vmul.f32 %v815, %v815
  %v908 = vmul.f32 %v818, %v818
  %v909 = vmul.f32 %v823, %v823
  %v910 = vmul.f32 %v826, %v826
  %v911 = vmul.f32 %v831, %v831
  %v912 = vmul.f32 %v834, %v834
  %v913 = vmul.f32 %v839, %v839
  %v914 = vmul.f32 %v842, %v842
  %v915 = vmul.f32 %v847, %v847
  %v916 = vmul.f32 %v850, %v850
  %vm917 = vcmask 261120
  %v918 = vsel %vm917, %v853, 0.0
  %919 = vadd.xlane.f32.xlu0 %v918
  %v920 = vpop.xlane.xlu0 %919
  %v921 = vsel %vm917, %v854, 0.0
  %922 = vadd.xlane.f32.xlu0 %v921
  %v923 = vpop.xlane.xlu0 %922
  %v924 = vsel %vm917, %v855, 0.0
  %925 = vadd.xlane.f32.xlu0 %v924
  %v926 = vpop.xlane.xlu0 %925
  %v927 = vsel %vm917, %v856, 0.0
  %928 = vadd.xlane.f32.xlu0 %v927
  %v929 = vpop.xlane.xlu0 %928
  %v930 = vsel %vm917, %v857, 0.0
  %931 = vadd.xlane.f32.xlu0 %v930
  %v932 = vpop.xlane.xlu0 %931
  %v933 = vsel %vm917, %v858, 0.0
  %934 = vadd.xlane.f32.xlu0 %v933
  %v935 = vpop.xlane.xlu0 %934
  %v936 = vsel %vm917, %v859, 0.0
  %937 = vadd.xlane.f32.xlu0 %v936
  %v938 = vpop.xlane.xlu0 %937
  %v939 = vsel %vm917, %v860, 0.0
  %940 = vadd.xlane.f32.xlu0 %v939
  %v941 = vpop.xlane.xlu0 %940
  %v942 = vsel %vm917, %v861, 0.0
  %943 = vadd.xlane.f32.xlu0 %v942
  %v944 = vpop.xlane.xlu0 %943
  %v945 = vsel %vm917, %v862, 0.0
  %946 = vadd.xlane.f32.xlu0 %v945
  %v947 = vpop.xlane.xlu0 %946
  %v948 = vsel %vm917, %v863, 0.0
  %949 = vadd.xlane.f32.xlu0 %v948
  %v950 = vpop.xlane.xlu0 %949
  %v951 = vsel %vm917, %v864, 0.0
  %952 = vadd.xlane.f32.xlu0 %v951
  %v953 = vpop.xlane.xlu0 %952
  %v954 = vsel %vm917, %v865, 0.0
  %955 = vadd.xlane.f32.xlu0 %v954
  %v956 = vpop.xlane.xlu0 %955
  %v957 = vsel %vm917, %v866, 0.0
  %958 = vadd.xlane.f32.xlu0 %v957
  %v959 = vpop.xlane.xlu0 %958
  %v960 = vsel %vm917, %v867, 0.0
  %961 = vadd.xlane.f32.xlu0 %v960
  %v962 = vpop.xlane.xlu0 %961
  %v963 = vsel %vm917, %v868, 0.0
  %964 = vadd.xlane.f32.xlu0 %v963
  %v965 = vpop.xlane.xlu0 %964
  %v966 = vsel %vm917, %v869, 0.0
  %967 = vadd.xlane.f32.xlu0 %v966
  %v968 = vpop.xlane.xlu0 %967
  %v969 = vsel %vm917, %v870, 0.0
  %970 = vadd.xlane.f32.xlu0 %v969
  %v971 = vpop.xlane.xlu0 %970
  %v972 = vsel %vm917, %v871, 0.0
  %973 = vadd.xlane.f32.xlu0 %v972
  %v974 = vpop.xlane.xlu0 %973
  %v975 = vsel %vm917, %v872, 0.0
  %976 = vadd.xlane.f32.xlu0 %v975
  %v977 = vpop.xlane.xlu0 %976
  %v978 = vsel %vm917, %v873, 0.0
  %979 = vadd.xlane.f32.xlu0 %v978
  %v980 = vpop.xlane.xlu0 %979
  %v981 = vsel %vm917, %v874, 0.0
  %982 = vadd.xlane.f32.xlu0 %v981
  %v983 = vpop.xlane.xlu0 %982
  %v984 = vsel %vm917, %v875, 0.0
  %985 = vadd.xlane.f32.xlu0 %v984
  %v986 = vpop.xlane.xlu0 %985
  %v987 = vsel %vm917, %v876, 0.0
  %988 = vadd.xlane.f32.xlu0 %v987
  %v989 = vpop.xlane.xlu0 %988
  %v990 = vsel %vm917, %v877, 0.0
  %991 = vadd.xlane.f32.xlu0 %v990
  %v992 = vpop.xlane.xlu0 %991
  %v993 = vsel %vm917, %v878, 0.0
  %994 = vadd.xlane.f32.xlu0 %v993
  %v995 = vpop.xlane.xlu0 %994
  %v996 = vsel %vm917, %v879, 0.0
  %997 = vadd.xlane.f32.xlu0 %v996
  %v998 = vpop.xlane.xlu0 %997
  %v999 = vsel %vm917, %v880, 0.0
  %1000 = vadd.xlane.f32.xlu0 %v999
  %v1001 = vpop.xlane.xlu0 %1000
  %v1002 = vsel %vm917, %v881, 0.0
  %1003 = vadd.xlane.f32.xlu0 %v1002
  %v1004 = vpop.xlane.xlu0 %1003
  %v1005 = vsel %vm917, %v882, 0.0
  %1006 = vadd.xlane.f32.xlu0 %v1005
  %v1007 = vpop.xlane.xlu0 %1006
  %v1008 = vsel %vm917, %v883, 0.0
  %1009 = vadd.xlane.f32.xlu0 %v1008
  %v1010 = vpop.xlane.xlu0 %1009
  %v1011 = vsel %vm917, %v884, 0.0
  %1012 = vadd.xlane.f32.xlu0 %v1011
  %v1013 = vpop.xlane.xlu0 %1012
  %v1014 = vsel %vm917, %v885, 0.0
  %1015 = vadd.xlane.f32.xlu0 %v1014
  %v1016 = vpop.xlane.xlu0 %1015
  %v1017 = vsel %vm917, %v886, 0.0
  %1018 = vadd.xlane.f32.xlu0 %v1017
  %v1019 = vpop.xlane.xlu0 %1018
  %v1020 = vsel %vm917, %v887, 0.0
  %1021 = vadd.xlane.f32.xlu0 %v1020
  %v1022 = vpop.xlane.xlu0 %1021
  %v1023 = vsel %vm917, %v888, 0.0
  %1024 = vadd.xlane.f32.xlu0 %v1023
  %v1025 = vpop.xlane.xlu0 %1024
  %v1026 = vsel %vm917, %v889, 0.0
  %1027 = vadd.xlane.f32.xlu0 %v1026
  %v1028 = vpop.xlane.xlu0 %1027
  %v1029 = vsel %vm917, %v890, 0.0
  %1030 = vadd.xlane.f32.xlu0 %v1029
  %v1031 = vpop.xlane.xlu0 %1030
  %v1032 = vsel %vm917, %v891, 0.0
  %1033 = vadd.xlane.f32.xlu0 %v1032
  %v1034 = vpop.xlane.xlu0 %1033
  %v1035 = vsel %vm917, %v892, 0.0
  %1036 = vadd.xlane.f32.xlu0 %v1035
  %v1037 = vpop.xlane.xlu0 %1036
  %v1038 = vsel %vm917, %v893, 0.0
  %1039 = vadd.xlane.f32.xlu0 %v1038
  %v1040 = vpop.xlane.xlu0 %1039
  %v1041 = vsel %vm917, %v894, 0.0
  %1042 = vadd.xlane.f32.xlu0 %v1041
  %v1043 = vpop.xlane.xlu0 %1042
  %v1044 = vsel %vm917, %v895, 0.0
  %1045 = vadd.xlane.f32.xlu0 %v1044
  %v1046 = vpop.xlane.xlu0 %1045
  %v1047 = vsel %vm917, %v896, 0.0
  %1048 = vadd.xlane.f32.xlu0 %v1047
  %v1049 = vpop.xlane.xlu0 %1048
  %v1050 = vsel %vm917, %v897, 0.0
  %1051 = vadd.xlane.f32.xlu0 %v1050
  %v1052 = vpop.xlane.xlu0 %1051
  %v1053 = vsel %vm917, %v898, 0.0
  %1054 = vadd.xlane.f32.xlu0 %v1053
  %v1055 = vpop.xlane.xlu0 %1054
  %v1056 = vsel %vm917, %v899, 0.0
  %1057 = vadd.xlane.f32.xlu0 %v1056
  %v1058 = vpop.xlane.xlu0 %1057
  %v1059 = vsel %vm917, %v900, 0.0
  %1060 = vadd.xlane.f32.xlu0 %v1059
  %v1061 = vpop.xlane.xlu0 %1060
  %v1062 = vsel %vm917, %v901, 0.0
  %1063 = vadd.xlane.f32.xlu0 %v1062
  %v1064 = vpop.xlane.xlu0 %1063
  %v1065 = vsel %vm917, %v902, 0.0
  %1066 = vadd.xlane.f32.xlu0 %v1065
  %v1067 = vpop.xlane.xlu0 %1066
  %v1068 = vsel %vm917, %v903, 0.0
  %1069 = vadd.xlane.f32.xlu0 %v1068
  %v1070 = vpop.xlane.xlu0 %1069
  %v1071 = vsel %vm917, %v904, 0.0
  %1072 = vadd.xlane.f32.xlu0 %v1071
  %v1073 = vpop.xlane.xlu0 %1072
  %v1074 = vsel %vm917, %v905, 0.0
  %1075 = vadd.xlane.f32.xlu0 %v1074
  %v1076 = vpop.xlane.xlu0 %1075
  %v1077 = vsel %vm917, %v906, 0.0
  %1078 = vadd.xlane.f32.xlu0 %v1077
  %v1079 = vpop.xlane.xlu0 %1078
  %v1080 = vsel %vm917, %v907, 0.0
  %1081 = vadd.xlane.f32.xlu0 %v1080
  %v1082 = vpop.xlane.xlu0 %1081
  %v1083 = vsel %vm917, %v908, 0.0
  %1084 = vadd.xlane.f32.xlu0 %v1083
  %v1085 = vpop.xlane.xlu0 %1084
  %v1086 = vsel %vm917, %v909, 0.0
  %1087 = vadd.xlane.f32.xlu0 %v1086
  %v1088 = vpop.xlane.xlu0 %1087
  %v1089 = vsel %vm917, %v910, 0.0
  %1090 = vadd.xlane.f32.xlu0 %v1089
  %v1091 = vpop.xlane.xlu0 %1090
  %v1092 = vsel %vm917, %v911, 0.0
  %1093 = vadd.xlane.f32.xlu0 %v1092
  %v1094 = vpop.xlane.xlu0 %1093
  %v1095 = vsel %vm917, %v912, 0.0
  %1096 = vadd.xlane.f32.xlu0 %v1095
  %v1097 = vpop.xlane.xlu0 %1096
  %v1098 = vsel %vm917, %v913, 0.0
  %1099 = vadd.xlane.f32.xlu0 %v1098
  %v1100 = vpop.xlane.xlu0 %1099
  %v1101 = vsel %vm917, %v914, 0.0
  %1102 = vadd.xlane.f32.xlu0 %v1101
  %v1103 = vpop.xlane.xlu0 %1102
  %v1104 = vsel %vm917, %v915, 0.0
  %1105 = vadd.xlane.f32.xlu0 %v1104
  %v1106 = vpop.xlane.xlu0 %1105
  %v1107 = vsel %vm917, %v916, 0.0
  %1108 = vadd.xlane.f32.xlu0 %v1107
  %v1109 = vpop.xlane.xlu0 %1108
  %v1110 = vmax.f32 %v920, 1e-12
  %v1111 = vmax.f32 %v923, 1e-12
  %v1112 = vmax.f32 %v926, 1e-12
  %v1113 = vmax.f32 %v929, 1e-12
  %v1114 = vmax.f32 %v932, 1e-12
  %v1115 = vmax.f32 %v935, 1e-12
  %v1116 = vmax.f32 %v938, 1e-12
  %v1117 = vmax.f32 %v941, 1e-12
  %v1118 = vmax.f32 %v944, 1e-12
  %v1119 = vmax.f32 %v947, 1e-12
  %v1120 = vmax.f32 %v950, 1e-12
  %v1121 = vmax.f32 %v953, 1e-12
  %v1122 = vmax.f32 %v956, 1e-12
  %v1123 = vmax.f32 %v959, 1e-12
  %v1124 = vmax.f32 %v962, 1e-12
  %v1125 = vmax.f32 %v965, 1e-12
  %v1126 = vmax.f32 %v968, 1e-12
  %v1127 = vmax.f32 %v971, 1e-12
  %v1128 = vmax.f32 %v974, 1e-12
  %v1129 = vmax.f32 %v977, 1e-12
  %v1130 = vmax.f32 %v980, 1e-12
  %v1131 = vmax.f32 %v983, 1e-12
  %v1132 = vmax.f32 %v986, 1e-12
  %v1133 = vmax.f32 %v989, 1e-12
  %v1134 = vmax.f32 %v992, 1e-12
  %v1135 = vmax.f32 %v995, 1e-12
  %v1136 = vmax.f32 %v998, 1e-12
  %v1137 = vmax.f32 %v1001, 1e-12
  %v1138 = vmax.f32 %v1004, 1e-12
  %v1139 = vmax.f32 %v1007, 1e-12
  %v1140 = vmax.f32 %v1010, 1e-12
  %v1141 = vmax.f32 %v1013, 1e-12
  %v1142 = vmax.f32 %v1016, 1e-12
  %v1143 = vmax.f32 %v1019, 1e-12
  %v1144 = vmax.f32 %v1022, 1e-12
  %v1145 = vmax.f32 %v1025, 1e-12
  %v1146 = vmax.f32 %v1028, 1e-12
  %v1147 = vmax.f32 %v1031, 1e-12
  %v1148 = vmax.f32 %v1034, 1e-12
  %v1149 = vmax.f32 %v1037, 1e-12
  %v1150 = vmax.f32 %v1040, 1e-12
  %v1151 = vmax.f32 %v1043, 1e-12
  %v1152 = vmax.f32 %v1046, 1e-12
  %v1153 = vmax.f32 %v1049, 1e-12
  %v1154 = vmax.f32 %v1052, 1e-12
  %v1155 = vmax.f32 %v1055, 1e-12
  %v1156 = vmax.f32 %v1058, 1e-12
  %v1157 = vmax.f32 %v1061, 1e-12
  %v1158 = vmax.f32 %v1064, 1e-12
  %v1159 = vmax.f32 %v1067, 1e-12
  %v1160 = vmax.f32 %v1070, 1e-12
  %v1161 = vmax.f32 %v1073, 1e-12
  %v1162 = vmax.f32 %v1076, 1e-12
  %v1163 = vmax.f32 %v1079, 1e-12
  %v1164 = vmax.f32 %v1082, 1e-12
  %v1165 = vmax.f32 %v1085, 1e-12
  %v1166 = vmax.f32 %v1088, 1e-12
  %v1167 = vmax.f32 %v1091, 1e-12
  %v1168 = vmax.f32 %v1094, 1e-12
  %v1169 = vmax.f32 %v1097, 1e-12
  %v1170 = vmax.f32 %v1100, 1e-12
  %v1171 = vmax.f32 %v1103, 1e-12
  %v1172 = vmax.f32 %v1106, 1e-12
  %v1173 = vmax.f32 %v1109, 1e-12
  %v1174 = vrsqrt.pop %v1110
  %v1175 = vrsqrt.pop %v1111
  %v1176 = vrsqrt.pop %v1112
  %v1177 = vrsqrt.pop %v1113
  %v1178 = vrsqrt.pop %v1114
  %v1179 = vrsqrt.pop %v1115
  %v1180 = vrsqrt.pop %v1116
  %v1181 = vrsqrt.pop %v1117
  %v1182 = vrsqrt.pop %v1118
  %v1183 = vrsqrt.pop %v1119
  %v1184 = vrsqrt.pop %v1120
  %v1185 = vrsqrt.pop %v1121
  %v1186 = vrsqrt.pop %v1122
  %v1187 = vrsqrt.pop %v1123
  %v1188 = vrsqrt.pop %v1124
  %v1189 = vrsqrt.pop %v1125
  %v1190 = vrsqrt.pop %v1126
  %v1191 = vrsqrt.pop %v1127
  %v1192 = vrsqrt.pop %v1128
  %v1193 = vrsqrt.pop %v1129
  %v1194 = vrsqrt.pop %v1130
  %v1195 = vrsqrt.pop %v1131
  %v1196 = vrsqrt.pop %v1132
  %v1197 = vrsqrt.pop %v1133
  %v1198 = vrsqrt.pop %v1134
  %v1199 = vrsqrt.pop %v1135
  %v1200 = vrsqrt.pop %v1136
  %v1201 = vrsqrt.pop %v1137
  %v1202 = vrsqrt.pop %v1138
  %v1203 = vrsqrt.pop %v1139
  %v1204 = vrsqrt.pop %v1140
  %v1205 = vrsqrt.pop %v1141
  %v1206 = vrsqrt.pop %v1142
  %v1207 = vrsqrt.pop %v1143
  %v1208 = vrsqrt.pop %v1144
  %v1209 = vrsqrt.pop %v1145
  %v1210 = vrsqrt.pop %v1146
  %v1211 = vrsqrt.pop %v1147
  %v1212 = vrsqrt.pop %v1148
  %v1213 = vrsqrt.pop %v1149
  %v1214 = vrsqrt.pop %v1150
  %v1215 = vrsqrt.pop %v1151
  %v1216 = vrsqrt.pop %v1152
  %v1217 = vrsqrt.pop %v1153
  %v1218 = vrsqrt.pop %v1154
  %v1219 = vrsqrt.pop %v1155
  %v1220 = vrsqrt.pop %v1156
  %v1221 = vrsqrt.pop %v1157
  %v1222 = vrsqrt.pop %v1158
  %v1223 = vrsqrt.pop %v1159
  %v1224 = vrsqrt.pop %v1160
  %v1225 = vrsqrt.pop %v1161
  %v1226 = vrsqrt.pop %v1162
  %v1227 = vrsqrt.pop %v1163
  %v1228 = vrsqrt.pop %v1164
  %v1229 = vrsqrt.pop %v1165
  %v1230 = vrsqrt.pop %v1166
  %v1231 = vrsqrt.pop %v1167
  %v1232 = vrsqrt.pop %v1168
  %v1233 = vrsqrt.pop %v1169
  %v1234 = vrsqrt.pop %v1170
  %v1235 = vrsqrt.pop %v1171
  %v1236 = vrsqrt.pop %v1172
  %v1237 = vrsqrt.pop %v1173
  %v1238 = vmul.f32 %v599, %v1174
  %v1239 = vmul.f32 %v602, %v1175
  %v1240 = vmul.f32 %v607, %v1176
  %v1241 = vmul.f32 %v610, %v1177
  %v1242 = vmul.f32 %v615, %v1178
  %v1243 = vmul.f32 %v618, %v1179
  %v1244 = vmul.f32 %v623, %v1180
  %v1245 = vmul.f32 %v626, %v1181
  %v1246 = vmul.f32 %v631, %v1182
  %v1247 = vmul.f32 %v634, %v1183
  %v1248 = vmul.f32 %v639, %v1184
  %v1249 = vmul.f32 %v642, %v1185
  %v1250 = vmul.f32 %v647, %v1186
  %v1251 = vmul.f32 %v650, %v1187
  %v1252 = vmul.f32 %v655, %v1188
  %v1253 = vmul.f32 %v658, %v1189
  %v1254 = vmul.f32 %v663, %v1190
  %v1255 = vmul.f32 %v666, %v1191
  %v1256 = vmul.f32 %v671, %v1192
  %v1257 = vmul.f32 %v674, %v1193
  %v1258 = vmul.f32 %v679, %v1194
  %v1259 = vmul.f32 %v682, %v1195
  %v1260 = vmul.f32 %v687, %v1196
  %v1261 = vmul.f32 %v690, %v1197
  %v1262 = vmul.f32 %v695, %v1198
  %v1263 = vmul.f32 %v698, %v1199
  %v1264 = vmul.f32 %v703, %v1200
  %v1265 = vmul.f32 %v706, %v1201
  %v1266 = vmul.f32 %v711, %v1202
  %v1267 = vmul.f32 %v714, %v1203
  %v1268 = vmul.f32 %v719, %v1204
  %v1269 = vmul.f32 %v722, %v1205
  %v1270 = vmul.f32 %v727, %v1206
  %v1271 = vmul.f32 %v730, %v1207
  %v1272 = vmul.f32 %v735, %v1208
  %v1273 = vmul.f32 %v738, %v1209
  %v1274 = vmul.f32 %v743, %v1210
  %v1275 = vmul.f32 %v746, %v1211
  %v1276 = vmul.f32 %v751, %v1212
  %v1277 = vmul.f32 %v754, %v1213
  %v1278 = vmul.f32 %v759, %v1214
  %v1279 = vmul.f32 %v762, %v1215
  %v1280 = vmul.f32 %v767, %v1216
  %v1281 = vmul.f32 %v770, %v1217
  %v1282 = vmul.f32 %v775, %v1218
  %v1283 = vmul.f32 %v778, %v1219
  %v1284 = vmul.f32 %v783, %v1220
  %v1285 = vmul.f32 %v786, %v1221
  %v1286 = vmul.f32 %v791, %v1222
  %v1287 = vmul.f32 %v794, %v1223
  %v1288 = vmul.f32 %v799, %v1224
  %v1289 = vmul.f32 %v802, %v1225
  %v1290 = vmul.f32 %v807, %v1226
  %v1291 = vmul.f32 %v810, %v1227
  %v1292 = vmul.f32 %v815, %v1228
  %v1293 = vmul.f32 %v818, %v1229
  %v1294 = vmul.f32 %v823, %v1230
  %v1295 = vmul.f32 %v826, %v1231
  %v1296 = vmul.f32 %v831, %v1232
  %v1297 = vmul.f32 %v834, %v1233
  %v1298 = vmul.f32 %v839, %v1234
  %v1299 = vmul.f32 %v842, %v1235
  %v1300 = vmul.f32 %v847, %v1236
  %v1301 = vmul.f32 %v850, %v1237
  %v1302 = vpack.c.bf16 %v1239, %v1238
  %v1303 = vpack.c.bf16 %v1241, %v1240
  %v1304 = vpack.c.bf16 %v1243, %v1242
  %v1305 = vpack.c.bf16 %v1245, %v1244
  %v1306 = vpack.c.bf16 %v1247, %v1246
  %v1307 = vpack.c.bf16 %v1249, %v1248
  %v1308 = vpack.c.bf16 %v1251, %v1250
  %v1309 = vpack.c.bf16 %v1253, %v1252
  %v1310 = vpack.c.bf16 %v1255, %v1254
  %v1311 = vpack.c.bf16 %v1257, %v1256
  %v1312 = vpack.c.bf16 %v1259, %v1258
  %v1313 = vpack.c.bf16 %v1261, %v1260
  %v1314 = vpack.c.bf16 %v1263, %v1262
  %v1315 = vpack.c.bf16 %v1265, %v1264
  %v1316 = vpack.c.bf16 %v1267, %v1266
  %v1317 = vpack.c.bf16 %v1269, %v1268
  %v1318 = vpack.c.bf16 %v1271, %v1270
  %v1319 = vpack.c.bf16 %v1273, %v1272
  %v1320 = vpack.c.bf16 %v1275, %v1274
  %v1321 = vpack.c.bf16 %v1277, %v1276
  %v1322 = vpack.c.bf16 %v1279, %v1278
  %v1323 = vpack.c.bf16 %v1281, %v1280
  %v1324 = vpack.c.bf16 %v1283, %v1282
  %v1325 = vpack.c.bf16 %v1285, %v1284
  %v1326 = vpack.c.bf16 %v1287, %v1286
  %v1327 = vpack.c.bf16 %v1289, %v1288
  %v1328 = vpack.c.bf16 %v1291, %v1290
  %v1329 = vpack.c.bf16 %v1293, %v1292
  %v1330 = vpack.c.bf16 %v1295, %v1294
  %v1331 = vpack.c.bf16 %v1297, %v1296
  %v1332 = vpack.c.bf16 %v1299, %v1298
  %v1333 = vpack.c.bf16 %v1301, %v1300
  %v1366 = vunpack.c.l.b16 %v1302
  %v1367 = vunpack.c.h.b16 %v1302
  %v1368 = vunpack.c.l.b16 %v1303
  %v1369 = vunpack.c.h.b16 %v1303
  %v1370 = vunpack.c.l.b16 %v1304
  %v1371 = vunpack.c.h.b16 %v1304
  %v1372 = vunpack.c.l.b16 %v1305
  %v1373 = vunpack.c.h.b16 %v1305
  %v1374 = vunpack.c.l.b16 %v1306
  %v1375 = vunpack.c.h.b16 %v1306
  %v1376 = vunpack.c.l.b16 %v1307
  %v1377 = vunpack.c.h.b16 %v1307
  %v1378 = vunpack.c.l.b16 %v1308
  %v1379 = vunpack.c.h.b16 %v1308
  %v1380 = vunpack.c.l.b16 %v1309
  %v1381 = vunpack.c.h.b16 %v1309
  %v1382 = vunpack.c.l.b16 %v1310
  %v1383 = vunpack.c.h.b16 %v1310
  %v1384 = vunpack.c.l.b16 %v1311
  %v1385 = vunpack.c.h.b16 %v1311
  %v1386 = vunpack.c.l.b16 %v1312
  %v1387 = vunpack.c.h.b16 %v1312
  %v1388 = vunpack.c.l.b16 %v1313
  %v1389 = vunpack.c.h.b16 %v1313
  %v1390 = vunpack.c.l.b16 %v1314
  %v1391 = vunpack.c.h.b16 %v1314
  %v1392 = vunpack.c.l.b16 %v1315
  %v1393 = vunpack.c.h.b16 %v1315
  %v1394 = vunpack.c.l.b16 %v1316
  %v1395 = vunpack.c.h.b16 %v1316
  %v1396 = vunpack.c.l.b16 %v1317
  %v1397 = vunpack.c.h.b16 %v1317
  %v1398 = vunpack.c.l.b16 %v1318
  %v1399 = vunpack.c.h.b16 %v1318
  %v1400 = vunpack.c.l.b16 %v1319
  %v1401 = vunpack.c.h.b16 %v1319
  %v1402 = vunpack.c.l.b16 %v1320
  %v1403 = vunpack.c.h.b16 %v1320
  %v1404 = vunpack.c.l.b16 %v1321
  %v1405 = vunpack.c.h.b16 %v1321
  %v1406 = vunpack.c.l.b16 %v1322
  %v1407 = vunpack.c.h.b16 %v1322
  %v1408 = vunpack.c.l.b16 %v1323
  %v1409 = vunpack.c.h.b16 %v1323
  %v1410 = vunpack.c.l.b16 %v1324
  %v1411 = vunpack.c.h.b16 %v1324
  %v1412 = vunpack.c.l.b16 %v1325
  %v1413 = vunpack.c.h.b16 %v1325
  %v1414 = vunpack.c.l.b16 %v1326
  %v1415 = vunpack.c.h.b16 %v1326
  %v1416 = vunpack.c.l.b16 %v1327
  %v1417 = vunpack.c.h.b16 %v1327
  %v1418 = vunpack.c.l.b16 %v1328
  %v1419 = vunpack.c.h.b16 %v1328
  %v1420 = vunpack.c.l.b16 %v1329
  %v1421 = vunpack.c.h.b16 %v1329
  %v1422 = vunpack.c.l.b16 %v1330
  %v1423 = vunpack.c.h.b16 %v1330
  %v1424 = vunpack.c.l.b16 %v1331
  %v1425 = vunpack.c.h.b16 %v1331
  %v1426 = vunpack.c.l.b16 %v1332
  %v1427 = vunpack.c.h.b16 %v1332
  %v1428 = vunpack.c.l.b16 %v1333
  %v1429 = vunpack.c.h.b16 %v1333
  %v1430 = vpack.c.b16 %v1366, %v1366
  %v1431 = vpack.c.b16 %v1367, %v1367
  %v1432 = vpack.c.b16 %v1368, %v1368
  %v1433 = vpack.c.b16 %v1369, %v1369
  %v1434 = vpack.c.b16 %v1370, %v1370
  %v1435 = vpack.c.b16 %v1371, %v1371
  %v1436 = vpack.c.b16 %v1372, %v1372
  %v1437 = vpack.c.b16 %v1373, %v1373
  %v1438 = vpack.c.b16 %v1374, %v1374
  %v1439 = vpack.c.b16 %v1375, %v1375
  %v1440 = vpack.c.b16 %v1376, %v1376
  %v1441 = vpack.c.b16 %v1377, %v1377
  %v1442 = vpack.c.b16 %v1378, %v1378
  %v1443 = vpack.c.b16 %v1379, %v1379
  %v1444 = vpack.c.b16 %v1380, %v1380
  %v1445 = vpack.c.b16 %v1381, %v1381
  %v1446 = vpack.c.b16 %v1382, %v1382
  %v1447 = vpack.c.b16 %v1383, %v1383
  %v1448 = vpack.c.b16 %v1384, %v1384
  %v1449 = vpack.c.b16 %v1385, %v1385
  %v1450 = vpack.c.b16 %v1386, %v1386
  %v1451 = vpack.c.b16 %v1387, %v1387
  %v1452 = vpack.c.b16 %v1388, %v1388
  %v1453 = vpack.c.b16 %v1389, %v1389
  %v1454 = vpack.c.b16 %v1390, %v1390
  %v1455 = vpack.c.b16 %v1391, %v1391
  %v1456 = vpack.c.b16 %v1392, %v1392
  %v1457 = vpack.c.b16 %v1393, %v1393
  %v1458 = vpack.c.b16 %v1394, %v1394
  %v1459 = vpack.c.b16 %v1395, %v1395
  %v1460 = vpack.c.b16 %v1396, %v1396
  %v1461 = vpack.c.b16 %v1397, %v1397
  %v1462 = vpack.c.b16 %v1398, %v1398
  %v1463 = vpack.c.b16 %v1399, %v1399
  %v1464 = vpack.c.b16 %v1400, %v1400
  %v1465 = vpack.c.b16 %v1401, %v1401
  %v1466 = vpack.c.b16 %v1402, %v1402
  %v1467 = vpack.c.b16 %v1403, %v1403
  %v1468 = vpack.c.b16 %v1404, %v1404
  %v1469 = vpack.c.b16 %v1405, %v1405
  %v1470 = vpack.c.b16 %v1406, %v1406
  %v1471 = vpack.c.b16 %v1407, %v1407
  %v1472 = vpack.c.b16 %v1408, %v1408
  %v1473 = vpack.c.b16 %v1409, %v1409
  %v1474 = vpack.c.b16 %v1410, %v1410
  %v1475 = vpack.c.b16 %v1411, %v1411
  %v1476 = vpack.c.b16 %v1412, %v1412
  %v1477 = vpack.c.b16 %v1413, %v1413
  %v1478 = vpack.c.b16 %v1414, %v1414
  %v1479 = vpack.c.b16 %v1415, %v1415
  %v1480 = vpack.c.b16 %v1416, %v1416
  %v1481 = vpack.c.b16 %v1417, %v1417
  %v1482 = vpack.c.b16 %v1418, %v1418
  %v1483 = vpack.c.b16 %v1419, %v1419
  %v1484 = vpack.c.b16 %v1420, %v1420
  %v1485 = vpack.c.b16 %v1421, %v1421
  %v1486 = vpack.c.b16 %v1422, %v1422
  %v1487 = vpack.c.b16 %v1423, %v1423
  %v1488 = vpack.c.b16 %v1424, %v1424
  %v1489 = vpack.c.b16 %v1425, %v1425
  %v1490 = vpack.c.b16 %v1426, %v1426
  %v1491 = vpack.c.b16 %v1427, %v1427
  %v1492 = vpack.c.b16 %v1428, %v1428
  %v1493 = vpack.c.b16 %v1429, %v1429
  %vm1558 = vcmask 257024
  %1559 = vst.msk [vmem:[%s3] sm:$0xf] %vm1558, %v1430
  %1560 = vst.msk [vmem:[%s3 + $0x4] sm:$0xf] %vm1558, %v1431
  %1561 = vst.msk [vmem:[%s3 + $0x8] sm:$0xf] %vm1558, %v1432
  %1562 = vst.msk [vmem:[%s3 + $0xc] sm:$0xf] %vm1558, %v1433
  %1563 = vst.msk [vmem:[%s3 + $0x10] sm:$0xf] %vm1558, %v1434
  %1564 = vst.msk [vmem:[%s3 + $0x14] sm:$0xf] %vm1558, %v1435
  %1565 = vst.msk [vmem:[%s3 + $0x18] sm:$0xf] %vm1558, %v1436
  %1566 = vst.msk [vmem:[%s3 + $0x1c] sm:$0xf] %vm1558, %v1437
  %1567 = vst.msk [vmem:[%s3 + $0x20] sm:$0xf] %vm1558, %v1438
  %1568 = vst.msk [vmem:[%s3 + $0x24] sm:$0xf] %vm1558, %v1439
  %1569 = vst.msk [vmem:[%s3 + $0x28] sm:$0xf] %vm1558, %v1440
  %1570 = vst.msk [vmem:[%s3 + $0x2c] sm:$0xf] %vm1558, %v1441
  %1571 = vst.msk [vmem:[%s3 + $0x30] sm:$0xf] %vm1558, %v1442
  %1572 = vst.msk [vmem:[%s3 + $0x34] sm:$0xf] %vm1558, %v1443
  %1573 = vst.msk [vmem:[%s3 + $0x38] sm:$0xf] %vm1558, %v1444
  %1574 = vst.msk [vmem:[%s3 + $0x3c] sm:$0xf] %vm1558, %v1445
  %1575 = vst.msk [vmem:[%s3 + $0x40] sm:$0xf] %vm1558, %v1446
  %1576 = vst.msk [vmem:[%s3 + $0x44] sm:$0xf] %vm1558, %v1447
  %1577 = vst.msk [vmem:[%s3 + $0x48] sm:$0xf] %vm1558, %v1448
  %1578 = vst.msk [vmem:[%s3 + $0x4c] sm:$0xf] %vm1558, %v1449
  %1579 = vst.msk [vmem:[%s3 + $0x50] sm:$0xf] %vm1558, %v1450
  %1580 = vst.msk [vmem:[%s3 + $0x54] sm:$0xf] %vm1558, %v1451
  %1581 = vst.msk [vmem:[%s3 + $0x58] sm:$0xf] %vm1558, %v1452
  %1582 = vst.msk [vmem:[%s3 + $0x5c] sm:$0xf] %vm1558, %v1453
  %1583 = vst.msk [vmem:[%s3 + $0x60] sm:$0xf] %vm1558, %v1454
  %1584 = vst.msk [vmem:[%s3 + $0x64] sm:$0xf] %vm1558, %v1455
  %1585 = vst.msk [vmem:[%s3 + $0x68] sm:$0xf] %vm1558, %v1456
  %1586 = vst.msk [vmem:[%s3 + $0x6c] sm:$0xf] %vm1558, %v1457
  %1587 = vst.msk [vmem:[%s3 + $0x70] sm:$0xf] %vm1558, %v1458
  %1588 = vst.msk [vmem:[%s3 + $0x74] sm:$0xf] %vm1558, %v1459
  %1589 = vst.msk [vmem:[%s3 + $0x78] sm:$0xf] %vm1558, %v1460
  %1590 = vst.msk [vmem:[%s3 + $0x7c] sm:$0xf] %vm1558, %v1461
  %1591 = vst.msk [vmem:[%s3 + $0x80] sm:$0xf] %vm1558, %v1462
  %1592 = vst.msk [vmem:[%s3 + $0x84] sm:$0xf] %vm1558, %v1463
  %1593 = vst.msk [vmem:[%s3 + $0x88] sm:$0xf] %vm1558, %v1464
  %1594 = vst.msk [vmem:[%s3 + $0x8c] sm:$0xf] %vm1558, %v1465
  %1595 = vst.msk [vmem:[%s3 + $0x90] sm:$0xf] %vm1558, %v1466
  %1596 = vst.msk [vmem:[%s3 + $0x94] sm:$0xf] %vm1558, %v1467
  %1597 = vst.msk [vmem:[%s3 + $0x98] sm:$0xf] %vm1558, %v1468
  %1598 = vst.msk [vmem:[%s3 + $0x9c] sm:$0xf] %vm1558, %v1469
  %1599 = vst.msk [vmem:[%s3 + $0xa0] sm:$0xf] %vm1558, %v1470
  %1600 = vst.msk [vmem:[%s3 + $0xa4] sm:$0xf] %vm1558, %v1471
  %1601 = vst.msk [vmem:[%s3 + $0xa8] sm:$0xf] %vm1558, %v1472
  %1602 = vst.msk [vmem:[%s3 + $0xac] sm:$0xf] %vm1558, %v1473
  %1603 = vst.msk [vmem:[%s3 + $0xb0] sm:$0xf] %vm1558, %v1474
  %1604 = vst.msk [vmem:[%s3 + $0xb4] sm:$0xf] %vm1558, %v1475
  %1605 = vst.msk [vmem:[%s3 + $0xb8] sm:$0xf] %vm1558, %v1476
  %1606 = vst.msk [vmem:[%s3 + $0xbc] sm:$0xf] %vm1558, %v1477
  %1607 = vst.msk [vmem:[%s3 + $0xc0] sm:$0xf] %vm1558, %v1478
  %1608 = vst.msk [vmem:[%s3 + $0xc4] sm:$0xf] %vm1558, %v1479
  %1609 = vst.msk [vmem:[%s3 + $0xc8] sm:$0xf] %vm1558, %v1480
  %1610 = vst.msk [vmem:[%s3 + $0xcc] sm:$0xf] %vm1558, %v1481
  %1611 = vst.msk [vmem:[%s3 + $0xd0] sm:$0xf] %vm1558, %v1482
  %1612 = vst.msk [vmem:[%s3 + $0xd4] sm:$0xf] %vm1558, %v1483
  %1613 = vst.msk [vmem:[%s3 + $0xd8] sm:$0xf] %vm1558, %v1484
  %1614 = vst.msk [vmem:[%s3 + $0xdc] sm:$0xf] %vm1558, %v1485
  %1615 = vst.msk [vmem:[%s3 + $0xe0] sm:$0xf] %vm1558, %v1486
  %1616 = vst.msk [vmem:[%s3 + $0xe4] sm:$0xf] %vm1558, %v1487
  %1617 = vst.msk [vmem:[%s3 + $0xe8] sm:$0xf] %vm1558, %v1488
  %1618 = vst.msk [vmem:[%s3 + $0xec] sm:$0xf] %vm1558, %v1489
  %1619 = vst.msk [vmem:[%s3 + $0xf0] sm:$0xf] %vm1558, %v1490
  %1620 = vst.msk [vmem:[%s3 + $0xf4] sm:$0xf] %vm1558, %v1491
  %1621 = vst.msk [vmem:[%s3 + $0xf8] sm:$0xf] %vm1558, %v1492
  %1622 = vst.msk [vmem:[%s3 + $0xfc] sm:$0xf] %vm1558, %v1493
  // Predicated region
  $region14: #{tpu_custom_call.1} parent=0 // pred_check
    _
  $region15: #{tpu_custom_call.1} parent=0 // pred_check_branch
    %1624 = sbr.rel (0) target = $region17
  $region16: #{tpu_custom_call.1} parent=0 // pred_region
    _
  $region17: #{tpu_custom_call.1} parent=0 // pred_fallthru
    _
  // Predicated region
  $region18: #{tpu_custom_call.1} parent=0 // pred_check
    _
  $region19: #{tpu_custom_call.1} parent=0 // pred_check_branch
    %1626 = sbr.rel (0) target = $region21
  $region20: #{tpu_custom_call.1} parent=0 // pred_region
    _
  $region21: #{tpu_custom_call.1} parent=0 // pred_fallthru
    _

</llo_original>
